<compile_context>
chip_gen: v5e
topology: v5e:2x2
jax: 0.10.0
libtpu: 0.0.40
codegen_flags: <defaults>
</compile_context>

<pallas_src>
import functools

import jax
import jax.numpy as jnp
import numpy as np
from jax import lax
from jax.experimental import pallas as pl
from jax.experimental.pallas import tpu as pltpu


# ----------------------------- model config ---------------------------------
D_X = 2
D_Y = 1
HIDDEN = 32
MIN_STD = 0.1
FEAT_PAD = 8       # padded per-point feature rows (x | y | mask | zeros) -> full sublane tile
BLOCK_B = 256      # batch lanes per grid step when B > BLOCK_B (multiple of 128)


# ------------------------------ Pallas kernel --------------------------------
def cnp_kernel(obs_ref, tgt_ref, w_ref, b_ref, out_ref, *, d_in, d_y, hidden, min_std):
    """One grid step processes `tb` batch elements (the lane axis) end-to-end."""
    f32 = jnp.float32
    nc, p, tb = obs_ref.shape
    nt = tgt_ref.shape[0]
    H = hidden

    # ---- fused weight/bias slabs; static slices are free ----
    w_e0 = w_ref[0 * H:1 * H, :p]              # (H, P)  cols >= d_in are zero (mask row -> 0)
    w_e1 = w_ref[1 * H:2 * H, :]               # (H, H)
    w_e2 = w_ref[2 * H:3 * H, :]               # (H, H)
    w_q0r = w_ref[3 * H:4 * H, :]              # (H, H)
    w_q0x = w_ref[4 * H:5 * H, :p]             # (H, P)  cols >= d_x are zero
    w_q1 = w_ref[5 * H:6 * H, :]               # (H, H)
    w_q2 = w_ref[6 * H:6 * H + 2 * d_y, :]     # (2*d_y, H)

    b_e0 = b_ref[:, 0:1]
    b_e1 = b_ref[:, 1:2]
    b_e2 = b_ref[:, 2:3]
    b_q0 = b_ref[:, 3:4]
    b_q1 = b_ref[:, 4:5]
    b_q2 = b_ref[0:2 * d_y, 5:6]

    # ---- encoder MLP + masked-mean aggregation, accumulated over context points ----
    acc = jnp.zeros((H, tb), f32)
    den = jnp.zeros((1, tb), f32)
    for c in range(nc):                        # static unroll (nc is small)
        xc = obs_ref[c]                        # (P, tb): rows = [x | y | mask | zeros]
        m = xc[d_in:d_in + 1, :]               # (1, tb) context mask row
        h = jnp.maximum(jnp.dot(w_e0, xc, preferred_element_type=f32) + b_e0, 0.0)
        h = jnp.maximum(jnp.dot(w_e1, h, preferred_element_type=f32) + b_e1, 0.0)
        h = jnp.dot(w_e2, h, preferred_element_type=f32) + b_e2
        acc = acc + h * m
        den = den + m
    # NOTE: an all-zero mask column gives den == 0 -> inf/nan, matching PyTorch.
    r = acc / den                              # (H, tb)

    # ---- decoder MLP; the r-part of layer 0 is shared by every target point ----
    rw = jnp.dot(w_q0r, r, preferred_element_type=f32) + b_q0        # (H, tb)
    mean_rows, std_rows = [], []
    for j in range(nt):                        # static unroll (nt is small)
        tj = tgt_ref[j]                        # (P, tb)
        q = jnp.maximum(rw + jnp.dot(w_q0x, tj, preferred_element_type=f32), 0.0)
        q = jnp.maximum(jnp.dot(w_q1, q, preferred_element_type=f32) + b_q1, 0.0)
        q = jnp.dot(w_q2, q, preferred_element_type=f32) + b_q2      # (2*d_y, tb)
        mean_rows.append(q[:d_y, :])
        std_rows.append(jax.nn.softplus(q[d_y:2 * d_y, :]) + min_std)

    # ---- single fused, lane-dense store: rows = [means for all targets; stds] ----
    out_ref[...] = jnp.concatenate(mean_rows + std_rows, axis=0).astype(out_ref.dtype)


# --------------------------- weight/bias packing ------------------------------
def _pack_params(params, d_y, hidden):
    """Pack transposed (H_out, K_in) weights and column-biases into two slabs."""
    f32 = jnp.float32
    H = hidden

    def place(w_t):
        w_t = jnp.asarray(w_t, f32)
        return jnp.zeros((H, H), f32).at[:w_t.shape[0], :w_t.shape[1]].set(w_t)

    w_slab = jnp.concatenate([
        place(params["we0"].T),      # (H, d_in)  in cols [:d_in]
        place(params["we1"].T),
        place(params["we2"].T),
        place(params["wq0r"].T),
        place(params["wq0x"].T),     # (H, d_x)   in cols [:d_x]
        place(params["wq1"].T),
        place(params["wq2"].T),      # (2*d_y, H) in rows [:2*d_y]
    ], axis=0)                       # (7*H, H)

    def bias_col(b):
        b = jnp.asarray(b, f32).reshape(-1)
        return jnp.zeros((H,), f32).at[:b.shape[0]].set(b)[:, None]

    b_slab = jnp.concatenate([
        bias_col(params["be0"]), bias_col(params["be1"]), bias_col(params["be2"]),
        bias_col(params["bq0"]), bias_col(params["bq1"]), bias_col(params["bq2"]),
        jnp.zeros((H, 2), f32),
    ], axis=1)                       # (H, 8)
    return w_slab, b_slab


# ------------------------------ wrapper --------------------------------------
def _cnp_forward_impl(params, observation, target, observation_mask=None, *,
                      block_b=BLOCK_B):
    f32 = jnp.float32
    B, Nc, d_in = observation.shape
    _, Nt, d_x = target.shape
    d_y = d_in - d_x
    H = params["we1"].shape[0]
    P = FEAT_PAD
    assert d_in + 1 <= P and d_x <= P and 2 * d_y <= H
    assert block_b % 128 == 0

    if B <= block_b:
        tb, grid_b, b_pad = B, 1, B            # one block, zero batch padding
    else:
        tb = block_b                           # multiple of 128 -> aligned lane tiles
        grid_b = pl.cdiv(B, tb)
        b_pad = grid_b * tb

    if observation_mask is None:
        mask = jnp.ones((B, Nc), f32)
    else:
        mask = observation_mask.astype(f32)

    # Lane-dense slabs: (points, feature-rows, batch).
    obs_t = jnp.transpose(observation.astype(f32), (1, 2, 0))          # (Nc, d_in, B)
    mask_t = jnp.transpose(mask, (1, 0))[:, None, :]                   # (Nc, 1, B)
    obs_host = jnp.concatenate(
        [obs_t, mask_t, jnp.zeros((Nc, P - d_in - 1, B), f32)], axis=1)  # (Nc, P, B)
    tgt_t = jnp.transpose(target.astype(f32), (1, 2, 0))               # (Nt, d_x, B)
    tgt_host = jnp.concatenate(
        [tgt_t, jnp.zeros((Nt, P - d_x, B), f32)], axis=1)             # (Nt, P, B)

    if b_pad != B:
        # Dummy batch columns get mask=1 so all math stays finite; their outputs
        # are sliced away below.
        pad_obs = jnp.zeros((Nc, P, b_pad - B), f32).at[:, d_in, :].set(1.0)
        obs_host = jnp.concatenate([obs_host, pad_obs], axis=2)
        tgt_host = jnp.concatenate(
            [tgt_host, jnp.zeros((Nt, P, b_pad - B), f32)], axis=2)

    w_slab, b_slab = _pack_params(params, d_y, H)

    kernel = functools.partial(cnp_kernel, d_in=d_in, d_y=d_y, hidden=H,
                               min_std=MIN_STD)

    out = pl.pallas_call(
        kernel,
        out_shape=jax.ShapeDtypeStruct((2 * d_y * Nt, b_pad), f32),
        grid_spec=pltpu.PrefetchScalarGridSpec(
            num_scalar_prefetch=0,
            grid=(grid_b,),
            in_specs=[
                pl.BlockSpec((Nc, P, tb), lambda g: (0, 0, g)),
                pl.BlockSpec((Nt, P, tb), lambda g: (0, 0, g)),
                pl.BlockSpec(w_slab.shape, lambda g: (0, 0)),
                pl.BlockSpec(b_slab.shape, lambda g: (0, 0)),
            ],
            out_specs=pl.BlockSpec((2 * d_y * Nt, tb), lambda g: (0, g)),
        ),
        compiler_params=pltpu.CompilerParams(
            dimension_semantics=("parallel",)),
    )(obs_host, tgt_host, w_slab, b_slab)

    out = out[:, :B]                                          # (2*d_y*Nt, B)
    mean = out[:d_y * Nt].reshape(Nt, d_y, B).transpose(2, 0, 1)
    std = out[d_y * Nt:].reshape(Nt, d_y, B).transpose(2, 0, 1)
    return mean, std


# jit the whole wrapper so the layout transforms fuse with the pads.
cnp_forward = jax.jit(_cnp_forward_impl, static_argnames=("block_b",))


# --------------------- deterministic parameter init --------------------------
def init_params(key, d_x, d_y, hidden):
    def linear(key, fan_in, fan_out):
        kw, kb = jax.random.split(key)
        bound = 1.0 / np.sqrt(fan_in)
        w = jax.random.uniform(kw, (fan_in, fan_out), jnp.float32, -bound, bound)
        b = jax.random.uniform(kb, (1, fan_out), jnp.float32, -bound, bound)
        return w, b

    keys = jax.random.split(key, 6)
    p = {}
    # encoder: (d_x+d_y -> H), (H -> H), (H -> H)   [num_hidden_layers = 2]
    p["we0"], p["be0"] = linear(keys[0], d_x + d_y, hidden)
    p["we1"], p["be1"] = linear(keys[1], hidden, hidden)
    p["we2"], p["be2"] = linear(keys[2], hidden, hidden)
    # decoder: (H + d_x -> H) split into (H -> H) and (d_x -> H), (H -> H), (H -> 2*d_y)
    wq0, p["bq0"] = linear(keys[3], hidden + d_x, hidden)
    p["wq0r"] = wq0[:hidden, :]
    p["wq0x"] = wq0[hidden:, :]
    p["wq1"], p["bq1"] = linear(keys[4], hidden, hidden)
    p["wq2"], p["bq2"] = linear(keys[5], hidden, 2 * d_y)
    return p


# ----------------------------- pure-JAX reference ----------------------------
def cnp_forward_ref(params, observation, target, observation_mask=None):
    mm = functools.partial(jnp.matmul, precision=lax.Precision.HIGHEST)
    d_y = observation.shape[-1] - target.shape[-1]
    h = jnp.maximum(mm(observation, params["we0"]) + params["be0"], 0.0)
    h = jnp.maximum(mm(h, params["we1"]) + params["be1"], 0.0)
    h = mm(h, params["we2"]) + params["be2"]
    if observation_mask is None:
        r = h.mean(axis=1)
    else:
        m = observation_mask[..., None]
        r = (h * m).sum(axis=1) / observation_mask.sum(axis=1, keepdims=True)
    Nt = target.shape[1]
    r_rep = jnp.repeat(r[:, None, :], Nt, axis=1)
    h_cat = jnp.concatenate([r_rep, target], axis=-1)
    wq0 = jnp.concatenate([params["wq0r"], params["wq0x"]], axis=0)
    q = jnp.maximum(mm(h_cat, wq0) + params["bq0"], 0.0)
    q = jnp.maximum(mm(q, params["wq1"]) + params["bq1"], 0.0)
    q = mm(q, params["wq2"]) + params["bq2"]
    mean = q[..., :d_y]
    std = jax.nn.softplus(q[..., d_y:]) + MIN_STD
    return mean, std


# --------------------------------- main ---------------------------------------
if __name__ == "__main__":
    key = jax.random.PRNGKey(0)
    kp, kdata = jax.random.split(key)

    Nc, Nt = 8, 8
    params = init_params(kp, D_X, D_Y, HIDDEN)

    # (B, block_b):
    #   (2, 256)   -> tiny single block
    #   (200, 256) -> single block, zero batch padding (v5e/v6e-friendly path)
    #   (200, 128) -> gridded path: 2 blocks + batch padding + "parallel" axis
    for B, blk in ((2, BLOCK_B), (200, BLOCK_B), (200, 128)):
        ko, kt, km = jax.random.split(jax.random.fold_in(kdata, B * 1000 + blk), 3)
        observation = jax.random.normal(ko, (B, Nc, D_X + D_Y), jnp.float32)
        target = jax.random.normal(kt, (B, Nt, D_X), jnp.float32)
        observation_mask = (jax.random.uniform(km, (B, Nc)) > 0.3).astype(jnp.float32)
        observation_mask = observation_mask.at[:, 0].set(1.0)  # >=1 valid context point

        mean, std = cnp_forward(params, observation, target, observation_mask, block_b=blk)
        jax.block_until_ready((mean, std))
        mean_r, std_r = cnp_forward_ref(params, observation, target, observation_mask)
        np.testing.assert_allclose(np.asarray(mean), np.asarray(mean_r), rtol=1e-4, atol=1e-4)
        np.testing.assert_allclose(np.asarray(std), np.asarray(std_r), rtol=1e-4, atol=1e-4)

        # observation_mask=None path (plain mean aggregation)
        mean2, std2 = cnp_forward(params, observation, target, None, block_b=blk)
        jax.block_until_ready((mean2, std2))
        mean2_r, std2_r = cnp_forward_ref(params, observation, target, None)
        np.testing.assert_allclose(np.asarray(mean2), np.asarray(mean2_r), rtol=1e-4, atol=1e-4)
        np.testing.assert_allclose(np.asarray(std2), np.asarray(std2_r), rtol=1e-4, atol=1e-4)

    print("KERNEL_OK")
</pallas_src>

<mosaic_0001>
module attributes {stable_mosaic.version = 11 : i64} {
  func.func @cnp_kernel(%arg0: i32, %arg1: memref<8x8x2xf32, #tpu.memory_space<vmem>>, %arg2: memref<8x8x2xf32, #tpu.memory_space<vmem>>, %arg3: memref<224x32xf32, #tpu.memory_space<vmem>>, %arg4: memref<32x8xf32, #tpu.memory_space<vmem>>, %arg5: memref<16x2xf32, #tpu.memory_space<vmem>>) attributes {dimension_semantics = [#tpu.dimension_semantics<parallel>], iteration_bounds = array<i64: 1>, scalar_prefetch = 0 : i64, scratch_operands = 0 : i64, tpu.core_type = #tpu.core_type<tc>, window_params = [{transform_indices = @transform_0, window_bounds = array<i64: 8, 8, 2>}, {transform_indices = @transform_1, window_bounds = array<i64: 8, 8, 2>}, {pipeline_mode = #tpu.pipeline_mode<synchronous>, transform_indices = @transform_2, window_bounds = array<i64: 224, 32>}, {pipeline_mode = #tpu.pipeline_mode<synchronous>, transform_indices = @transform_3, window_bounds = array<i64: 32, 8>}, {transform_indices = @transform_4, window_bounds = array<i64: 16, 2>}]} {
    %c0 = arith.constant 0 : index
    %c0_0 = arith.constant 0 : index
    %0 = vector.load %arg3[%c0, %c0_0] : memref<224x32xf32, #tpu.memory_space<vmem>>, vector<32x8xf32>
    %c32 = arith.constant 32 : index
    %c0_1 = arith.constant 0 : index
    %1 = vector.load %arg3[%c32, %c0_1] : memref<224x32xf32, #tpu.memory_space<vmem>>, vector<32x32xf32>
    %c64 = arith.constant 64 : index
    %c0_2 = arith.constant 0 : index
    %2 = vector.load %arg3[%c64, %c0_2] : memref<224x32xf32, #tpu.memory_space<vmem>>, vector<32x32xf32>
    %c96 = arith.constant 96 : index
    %c0_3 = arith.constant 0 : index
    %3 = vector.load %arg3[%c96, %c0_3] : memref<224x32xf32, #tpu.memory_space<vmem>>, vector<32x32xf32>
    %c128 = arith.constant 128 : index
    %c0_4 = arith.constant 0 : index
    %4 = vector.load %arg3[%c128, %c0_4] : memref<224x32xf32, #tpu.memory_space<vmem>>, vector<32x8xf32>
    %c160 = arith.constant 160 : index
    %c0_5 = arith.constant 0 : index
    %5 = vector.load %arg3[%c160, %c0_5] : memref<224x32xf32, #tpu.memory_space<vmem>>, vector<32x32xf32>
    %c192 = arith.constant 192 : index
    %c0_6 = arith.constant 0 : index
    %6 = vector.load %arg3[%c192, %c0_6] : memref<224x32xf32, #tpu.memory_space<vmem>>, vector<2x32xf32>
    %c0_7 = arith.constant 0 : index
    %c0_8 = arith.constant 0 : index
    %7 = vector.load %arg4[%c0_7, %c0_8] : memref<32x8xf32, #tpu.memory_space<vmem>>, vector<32x1xf32>
    %c0_9 = arith.constant 0 : index
    %c1 = arith.constant 1 : index
    %8 = vector.load %arg4[%c0_9, %c1] : memref<32x8xf32, #tpu.memory_space<vmem>>, vector<32x1xf32>
    %c0_10 = arith.constant 0 : index
    %c2 = arith.constant 2 : index
    %9 = vector.load %arg4[%c0_10, %c2] : memref<32x8xf32, #tpu.memory_space<vmem>>, vector<32x1xf32>
    %c0_11 = arith.constant 0 : index
    %c3 = arith.constant 3 : index
    %10 = vector.load %arg4[%c0_11, %c3] : memref<32x8xf32, #tpu.memory_space<vmem>>, vector<32x1xf32>
    %c0_12 = arith.constant 0 : index
    %c4 = arith.constant 4 : index
    %11 = vector.load %arg4[%c0_12, %c4] : memref<32x8xf32, #tpu.memory_space<vmem>>, vector<32x1xf32>
    %c0_13 = arith.constant 0 : index
    %c5 = arith.constant 5 : index
    %12 = vector.load %arg4[%c0_13, %c5] : memref<32x8xf32, #tpu.memory_space<vmem>>, vector<2x1xf32>
    %cst = arith.constant 0.000000e+00 : f32
    %13 = vector.broadcast %cst : f32 to vector<32x2xf32>
    %cst_14 = arith.constant 0.000000e+00 : f32
    %14 = vector.broadcast %cst_14 : f32 to vector<1x2xf32>
    %c0_15 = arith.constant 0 : index
    %c0_16 = arith.constant 0 : index
    %c0_17 = arith.constant 0 : index
    %15 = vector.load %arg1[%c0_15, %c0_16, %c0_17] : memref<8x8x2xf32, #tpu.memory_space<vmem>>, vector<1x8x2xf32>
    %16 = vector.shape_cast %15 : vector<1x8x2xf32> to vector<8x2xf32>
    %17 = vector.extract_strided_slice %16 {offsets = [3, 0], sizes = [1, 2], strides = [1, 1]} : vector<8x2xf32> to vector<1x2xf32>
    %cst_18 = arith.constant dense<0.000000e+00> : vector<32x2xf32>
    %18 = tpu.matmul %0, %16, %cst_18 {dimension_numbers = #tpu.dot_dimension_numbers<[1], [0], [0], [1], [0, 0, 1, 1], [], []>} : vector<32x8xf32>, vector<8x2xf32>, vector<32x2xf32> -> vector<32x2xf32>
    %19 = vector.broadcast %7 : vector<32x1xf32> to vector<32x2xf32>
    %20 = arith.addf %18, %19 : vector<32x2xf32>
    %cst_19 = arith.constant 0.000000e+00 : f32
    %21 = vector.broadcast %cst_19 : f32 to vector<32x2xf32>
    %22 = arith.maximumf %20, %21 : vector<32x2xf32>
    %cst_20 = arith.constant dense<0.000000e+00> : vector<32x2xf32>
    %23 = tpu.matmul %1, %22, %cst_20 {dimension_numbers = #tpu.dot_dimension_numbers<[1], [0], [0], [1], [0, 0, 1, 1], [], []>} : vector<32x32xf32>, vector<32x2xf32>, vector<32x2xf32> -> vector<32x2xf32>
    %24 = vector.broadcast %8 : vector<32x1xf32> to vector<32x2xf32>
    %25 = arith.addf %23, %24 : vector<32x2xf32>
    %cst_21 = arith.constant 0.000000e+00 : f32
    %26 = vector.broadcast %cst_21 : f32 to vector<32x2xf32>
    %27 = arith.maximumf %25, %26 : vector<32x2xf32>
    %cst_22 = arith.constant dense<0.000000e+00> : vector<32x2xf32>
    %28 = tpu.matmul %2, %27, %cst_22 {dimension_numbers = #tpu.dot_dimension_numbers<[1], [0], [0], [1], [0, 0, 1, 1], [], []>} : vector<32x32xf32>, vector<32x2xf32>, vector<32x2xf32> -> vector<32x2xf32>
    %29 = vector.broadcast %9 : vector<32x1xf32> to vector<32x2xf32>
    %30 = arith.addf %28, %29 : vector<32x2xf32>
    %31 = vector.broadcast %17 : vector<1x2xf32> to vector<32x2xf32>
    %32 = arith.mulf %30, %31 : vector<32x2xf32>
    %33 = arith.addf %13, %32 : vector<32x2xf32>
    %34 = arith.addf %14, %17 : vector<1x2xf32>
    %c1_23 = arith.constant 1 : index
    %c0_24 = arith.constant 0 : index
    %c0_25 = arith.constant 0 : index
    %35 = vector.load %arg1[%c1_23, %c0_24, %c0_25] : memref<8x8x2xf32, #tpu.memory_space<vmem>>, vector<1x8x2xf32>
    %36 = vector.shape_cast %35 : vector<1x8x2xf32> to vector<8x2xf32>
    %37 = vector.extract_strided_slice %36 {offsets = [3, 0], sizes = [1, 2], strides = [1, 1]} : vector<8x2xf32> to vector<1x2xf32>
    %cst_26 = arith.constant dense<0.000000e+00> : vector<32x2xf32>
    %38 = tpu.matmul %0, %36, %cst_26 {dimension_numbers = #tpu.dot_dimension_numbers<[1], [0], [0], [1], [0, 0, 1, 1], [], []>} : vector<32x8xf32>, vector<8x2xf32>, vector<32x2xf32> -> vector<32x2xf32>
    %39 = vector.broadcast %7 : vector<32x1xf32> to vector<32x2xf32>
    %40 = arith.addf %38, %39 : vector<32x2xf32>
    %cst_27 = arith.constant 0.000000e+00 : f32
    %41 = vector.broadcast %cst_27 : f32 to vector<32x2xf32>
    %42 = arith.maximumf %40, %41 : vector<32x2xf32>
    %cst_28 = arith.constant dense<0.000000e+00> : vector<32x2xf32>
    %43 = tpu.matmul %1, %42, %cst_28 {dimension_numbers = #tpu.dot_dimension_numbers<[1], [0], [0], [1], [0, 0, 1, 1], [], []>} : vector<32x32xf32>, vector<32x2xf32>, vector<32x2xf32> -> vector<32x2xf32>
    %44 = vector.broadcast %8 : vector<32x1xf32> to vector<32x2xf32>
    %45 = arith.addf %43, %44 : vector<32x2xf32>
    %cst_29 = arith.constant 0.000000e+00 : f32
    %46 = vector.broadcast %cst_29 : f32 to vector<32x2xf32>
    %47 = arith.maximumf %45, %46 : vector<32x2xf32>
    %cst_30 = arith.constant dense<0.000000e+00> : vector<32x2xf32>
    %48 = tpu.matmul %2, %47, %cst_30 {dimension_numbers = #tpu.dot_dimension_numbers<[1], [0], [0], [1], [0, 0, 1, 1], [], []>} : vector<32x32xf32>, vector<32x2xf32>, vector<32x2xf32> -> vector<32x2xf32>
    %49 = vector.broadcast %9 : vector<32x1xf32> to vector<32x2xf32>
    %50 = arith.addf %48, %49 : vector<32x2xf32>
    %51 = vector.broadcast %37 : vector<1x2xf32> to vector<32x2xf32>
    %52 = arith.mulf %50, %51 : vector<32x2xf32>
    %53 = arith.addf %33, %52 : vector<32x2xf32>
    %54 = arith.addf %34, %37 : vector<1x2xf32>
    %c2_31 = arith.constant 2 : index
    %c0_32 = arith.constant 0 : index
    %c0_33 = arith.constant 0 : index
    %55 = vector.load %arg1[%c2_31, %c0_32, %c0_33] : memref<8x8x2xf32, #tpu.memory_space<vmem>>, vector<1x8x2xf32>
    %56 = vector.shape_cast %55 : vector<1x8x2xf32> to vector<8x2xf32>
    %57 = vector.extract_strided_slice %56 {offsets = [3, 0], sizes = [1, 2], strides = [1, 1]} : vector<8x2xf32> to vector<1x2xf32>
    %cst_34 = arith.constant dense<0.000000e+00> : vector<32x2xf32>
    %58 = tpu.matmul %0, %56, %cst_34 {dimension_numbers = #tpu.dot_dimension_numbers<[1], [0], [0], [1], [0, 0, 1, 1], [], []>} : vector<32x8xf32>, vector<8x2xf32>, vector<32x2xf32> -> vector<32x2xf32>
    %59 = vector.broadcast %7 : vector<32x1xf32> to vector<32x2xf32>
    %60 = arith.addf %58, %59 : vector<32x2xf32>
    %cst_35 = arith.constant 0.000000e+00 : f32
    %61 = vector.broadcast %cst_35 : f32 to vector<32x2xf32>
    %62 = arith.maximumf %60, %61 : vector<32x2xf32>
    %cst_36 = arith.constant dense<0.000000e+00> : vector<32x2xf32>
    %63 = tpu.matmul %1, %62, %cst_36 {dimension_numbers = #tpu.dot_dimension_numbers<[1], [0], [0], [1], [0, 0, 1, 1], [], []>} : vector<32x32xf32>, vector<32x2xf32>, vector<32x2xf32> -> vector<32x2xf32>
    %64 = vector.broadcast %8 : vector<32x1xf32> to vector<32x2xf32>
    %65 = arith.addf %63, %64 : vector<32x2xf32>
    %cst_37 = arith.constant 0.000000e+00 : f32
    %66 = vector.broadcast %cst_37 : f32 to vector<32x2xf32>
    %67 = arith.maximumf %65, %66 : vector<32x2xf32>
    %cst_38 = arith.constant dense<0.000000e+00> : vector<32x2xf32>
    %68 = tpu.matmul %2, %67, %cst_38 {dimension_numbers = #tpu.dot_dimension_numbers<[1], [0], [0], [1], [0, 0, 1, 1], [], []>} : vector<32x32xf32>, vector<32x2xf32>, vector<32x2xf32> -> vector<32x2xf32>
    %69 = vector.broadcast %9 : vector<32x1xf32> to vector<32x2xf32>
    %70 = arith.addf %68, %69 : vector<32x2xf32>
    %71 = vector.broadcast %57 : vector<1x2xf32> to vector<32x2xf32>
    %72 = arith.mulf %70, %71 : vector<32x2xf32>
    %73 = arith.addf %53, %72 : vector<32x2xf32>
    %74 = arith.addf %54, %57 : vector<1x2xf32>
    %c3_39 = arith.constant 3 : index
    %c0_40 = arith.constant 0 : index
    %c0_41 = arith.constant 0 : index
    %75 = vector.load %arg1[%c3_39, %c0_40, %c0_41] : memref<8x8x2xf32, #tpu.memory_space<vmem>>, vector<1x8x2xf32>
    %76 = vector.shape_cast %75 : vector<1x8x2xf32> to vector<8x2xf32>
    %77 = vector.extract_strided_slice %76 {offsets = [3, 0], sizes = [1, 2], strides = [1, 1]} : vector<8x2xf32> to vector<1x2xf32>
    %cst_42 = arith.constant dense<0.000000e+00> : vector<32x2xf32>
    %78 = tpu.matmul %0, %76, %cst_42 {dimension_numbers = #tpu.dot_dimension_numbers<[1], [0], [0], [1], [0, 0, 1, 1], [], []>} : vector<32x8xf32>, vector<8x2xf32>, vector<32x2xf32> -> vector<32x2xf32>
    %79 = vector.broadcast %7 : vector<32x1xf32> to vector<32x2xf32>
    %80 = arith.addf %78, %79 : vector<32x2xf32>
    %cst_43 = arith.constant 0.000000e+00 : f32
    %81 = vector.broadcast %cst_43 : f32 to vector<32x2xf32>
    %82 = arith.maximumf %80, %81 : vector<32x2xf32>
    %cst_44 = arith.constant dense<0.000000e+00> : vector<32x2xf32>
    %83 = tpu.matmul %1, %82, %cst_44 {dimension_numbers = #tpu.dot_dimension_numbers<[1], [0], [0], [1], [0, 0, 1, 1], [], []>} : vector<32x32xf32>, vector<32x2xf32>, vector<32x2xf32> -> vector<32x2xf32>
    %84 = vector.broadcast %8 : vector<32x1xf32> to vector<32x2xf32>
    %85 = arith.addf %83, %84 : vector<32x2xf32>
    %cst_45 = arith.constant 0.000000e+00 : f32
    %86 = vector.broadcast %cst_45 : f32 to vector<32x2xf32>
    %87 = arith.maximumf %85, %86 : vector<32x2xf32>
    %cst_46 = arith.constant dense<0.000000e+00> : vector<32x2xf32>
    %88 = tpu.matmul %2, %87, %cst_46 {dimension_numbers = #tpu.dot_dimension_numbers<[1], [0], [0], [1], [0, 0, 1, 1], [], []>} : vector<32x32xf32>, vector<32x2xf32>, vector<32x2xf32> -> vector<32x2xf32>
    %89 = vector.broadcast %9 : vector<32x1xf32> to vector<32x2xf32>
    %90 = arith.addf %88, %89 : vector<32x2xf32>
    %91 = vector.broadcast %77 : vector<1x2xf32> to vector<32x2xf32>
    %92 = arith.mulf %90, %91 : vector<32x2xf32>
    %93 = arith.addf %73, %92 : vector<32x2xf32>
    %94 = arith.addf %74, %77 : vector<1x2xf32>
    %c4_47 = arith.constant 4 : index
    %c0_48 = arith.constant 0 : index
    %c0_49 = arith.constant 0 : index
    %95 = vector.load %arg1[%c4_47, %c0_48, %c0_49] : memref<8x8x2xf32, #tpu.memory_space<vmem>>, vector<1x8x2xf32>
    %96 = vector.shape_cast %95 : vector<1x8x2xf32> to vector<8x2xf32>
    %97 = vector.extract_strided_slice %96 {offsets = [3, 0], sizes = [1, 2], strides = [1, 1]} : vector<8x2xf32> to vector<1x2xf32>
    %cst_50 = arith.constant dense<0.000000e+00> : vector<32x2xf32>
    %98 = tpu.matmul %0, %96, %cst_50 {dimension_numbers = #tpu.dot_dimension_numbers<[1], [0], [0], [1], [0, 0, 1, 1], [], []>} : vector<32x8xf32>, vector<8x2xf32>, vector<32x2xf32> -> vector<32x2xf32>
    %99 = vector.broadcast %7 : vector<32x1xf32> to vector<32x2xf32>
    %100 = arith.addf %98, %99 : vector<32x2xf32>
    %cst_51 = arith.constant 0.000000e+00 : f32
    %101 = vector.broadcast %cst_51 : f32 to vector<32x2xf32>
    %102 = arith.maximumf %100, %101 : vector<32x2xf32>
    %cst_52 = arith.constant dense<0.000000e+00> : vector<32x2xf32>
    %103 = tpu.matmul %1, %102, %cst_52 {dimension_numbers = #tpu.dot_dimension_numbers<[1], [0], [0], [1], [0, 0, 1, 1], [], []>} : vector<32x32xf32>, vector<32x2xf32>, vector<32x2xf32> -> vector<32x2xf32>
    %104 = vector.broadcast %8 : vector<32x1xf32> to vector<32x2xf32>
    %105 = arith.addf %103, %104 : vector<32x2xf32>
    %cst_53 = arith.constant 0.000000e+00 : f32
    %106 = vector.broadcast %cst_53 : f32 to vector<32x2xf32>
    %107 = arith.maximumf %105, %106 : vector<32x2xf32>
    %cst_54 = arith.constant dense<0.000000e+00> : vector<32x2xf32>
    %108 = tpu.matmul %2, %107, %cst_54 {dimension_numbers = #tpu.dot_dimension_numbers<[1], [0], [0], [1], [0, 0, 1, 1], [], []>} : vector<32x32xf32>, vector<32x2xf32>, vector<32x2xf32> -> vector<32x2xf32>
    %109 = vector.broadcast %9 : vector<32x1xf32> to vector<32x2xf32>
    %110 = arith.addf %108, %109 : vector<32x2xf32>
    %111 = vector.broadcast %97 : vector<1x2xf32> to vector<32x2xf32>
    %112 = arith.mulf %110, %111 : vector<32x2xf32>
    %113 = arith.addf %93, %112 : vector<32x2xf32>
    %114 = arith.addf %94, %97 : vector<1x2xf32>
    %c5_55 = arith.constant 5 : index
    %c0_56 = arith.constant 0 : index
    %c0_57 = arith.constant 0 : index
    %115 = vector.load %arg1[%c5_55, %c0_56, %c0_57] : memref<8x8x2xf32, #tpu.memory_space<vmem>>, vector<1x8x2xf32>
    %116 = vector.shape_cast %115 : vector<1x8x2xf32> to vector<8x2xf32>
    %117 = vector.extract_strided_slice %116 {offsets = [3, 0], sizes = [1, 2], strides = [1, 1]} : vector<8x2xf32> to vector<1x2xf32>
    %cst_58 = arith.constant dense<0.000000e+00> : vector<32x2xf32>
    %118 = tpu.matmul %0, %116, %cst_58 {dimension_numbers = #tpu.dot_dimension_numbers<[1], [0], [0], [1], [0, 0, 1, 1], [], []>} : vector<32x8xf32>, vector<8x2xf32>, vector<32x2xf32> -> vector<32x2xf32>
    %119 = vector.broadcast %7 : vector<32x1xf32> to vector<32x2xf32>
    %120 = arith.addf %118, %119 : vector<32x2xf32>
    %cst_59 = arith.constant 0.000000e+00 : f32
    %121 = vector.broadcast %cst_59 : f32 to vector<32x2xf32>
    %122 = arith.maximumf %120, %121 : vector<32x2xf32>
    %cst_60 = arith.constant dense<0.000000e+00> : vector<32x2xf32>
    %123 = tpu.matmul %1, %122, %cst_60 {dimension_numbers = #tpu.dot_dimension_numbers<[1], [0], [0], [1], [0, 0, 1, 1], [], []>} : vector<32x32xf32>, vector<32x2xf32>, vector<32x2xf32> -> vector<32x2xf32>
    %124 = vector.broadcast %8 : vector<32x1xf32> to vector<32x2xf32>
    %125 = arith.addf %123, %124 : vector<32x2xf32>
    %cst_61 = arith.constant 0.000000e+00 : f32
    %126 = vector.broadcast %cst_61 : f32 to vector<32x2xf32>
    %127 = arith.maximumf %125, %126 : vector<32x2xf32>
    %cst_62 = arith.constant dense<0.000000e+00> : vector<32x2xf32>
    %128 = tpu.matmul %2, %127, %cst_62 {dimension_numbers = #tpu.dot_dimension_numbers<[1], [0], [0], [1], [0, 0, 1, 1], [], []>} : vector<32x32xf32>, vector<32x2xf32>, vector<32x2xf32> -> vector<32x2xf32>
    %129 = vector.broadcast %9 : vector<32x1xf32> to vector<32x2xf32>
    %130 = arith.addf %128, %129 : vector<32x2xf32>
    %131 = vector.broadcast %117 : vector<1x2xf32> to vector<32x2xf32>
    %132 = arith.mulf %130, %131 : vector<32x2xf32>
    %133 = arith.addf %113, %132 : vector<32x2xf32>
    %134 = arith.addf %114, %117 : vector<1x2xf32>
    %c6 = arith.constant 6 : index
    %c0_63 = arith.constant 0 : index
    %c0_64 = arith.constant 0 : index
    %135 = vector.load %arg1[%c6, %c0_63, %c0_64] : memref<8x8x2xf32, #tpu.memory_space<vmem>>, vector<1x8x2xf32>
    %136 = vector.shape_cast %135 : vector<1x8x2xf32> to vector<8x2xf32>
    %137 = vector.extract_strided_slice %136 {offsets = [3, 0], sizes = [1, 2], strides = [1, 1]} : vector<8x2xf32> to vector<1x2xf32>
    %cst_65 = arith.constant dense<0.000000e+00> : vector<32x2xf32>
    %138 = tpu.matmul %0, %136, %cst_65 {dimension_numbers = #tpu.dot_dimension_numbers<[1], [0], [0], [1], [0, 0, 1, 1], [], []>} : vector<32x8xf32>, vector<8x2xf32>, vector<32x2xf32> -> vector<32x2xf32>
    %139 = vector.broadcast %7 : vector<32x1xf32> to vector<32x2xf32>
    %140 = arith.addf %138, %139 : vector<32x2xf32>
    %cst_66 = arith.constant 0.000000e+00 : f32
    %141 = vector.broadcast %cst_66 : f32 to vector<32x2xf32>
    %142 = arith.maximumf %140, %141 : vector<32x2xf32>
    %cst_67 = arith.constant dense<0.000000e+00> : vector<32x2xf32>
    %143 = tpu.matmul %1, %142, %cst_67 {dimension_numbers = #tpu.dot_dimension_numbers<[1], [0], [0], [1], [0, 0, 1, 1], [], []>} : vector<32x32xf32>, vector<32x2xf32>, vector<32x2xf32> -> vector<32x2xf32>
    %144 = vector.broadcast %8 : vector<32x1xf32> to vector<32x2xf32>
    %145 = arith.addf %143, %144 : vector<32x2xf32>
    %cst_68 = arith.constant 0.000000e+00 : f32
    %146 = vector.broadcast %cst_68 : f32 to vector<32x2xf32>
    %147 = arith.maximumf %145, %146 : vector<32x2xf32>
    %cst_69 = arith.constant dense<0.000000e+00> : vector<32x2xf32>
    %148 = tpu.matmul %2, %147, %cst_69 {dimension_numbers = #tpu.dot_dimension_numbers<[1], [0], [0], [1], [0, 0, 1, 1], [], []>} : vector<32x32xf32>, vector<32x2xf32>, vector<32x2xf32> -> vector<32x2xf32>
    %149 = vector.broadcast %9 : vector<32x1xf32> to vector<32x2xf32>
    %150 = arith.addf %148, %149 : vector<32x2xf32>
    %151 = vector.broadcast %137 : vector<1x2xf32> to vector<32x2xf32>
    %152 = arith.mulf %150, %151 : vector<32x2xf32>
    %153 = arith.addf %133, %152 : vector<32x2xf32>
    %154 = arith.addf %134, %137 : vector<1x2xf32>
    %c7 = arith.constant 7 : index
    %c0_70 = arith.constant 0 : index
    %c0_71 = arith.constant 0 : index
    %155 = vector.load %arg1[%c7, %c0_70, %c0_71] : memref<8x8x2xf32, #tpu.memory_space<vmem>>, vector<1x8x2xf32>
    %156 = vector.shape_cast %155 : vector<1x8x2xf32> to vector<8x2xf32>
    %157 = vector.extract_strided_slice %156 {offsets = [3, 0], sizes = [1, 2], strides = [1, 1]} : vector<8x2xf32> to vector<1x2xf32>
    %cst_72 = arith.constant dense<0.000000e+00> : vector<32x2xf32>
    %158 = tpu.matmul %0, %156, %cst_72 {dimension_numbers = #tpu.dot_dimension_numbers<[1], [0], [0], [1], [0, 0, 1, 1], [], []>} : vector<32x8xf32>, vector<8x2xf32>, vector<32x2xf32> -> vector<32x2xf32>
    %159 = vector.broadcast %7 : vector<32x1xf32> to vector<32x2xf32>
    %160 = arith.addf %158, %159 : vector<32x2xf32>
    %cst_73 = arith.constant 0.000000e+00 : f32
    %161 = vector.broadcast %cst_73 : f32 to vector<32x2xf32>
    %162 = arith.maximumf %160, %161 : vector<32x2xf32>
    %cst_74 = arith.constant dense<0.000000e+00> : vector<32x2xf32>
    %163 = tpu.matmul %1, %162, %cst_74 {dimension_numbers = #tpu.dot_dimension_numbers<[1], [0], [0], [1], [0, 0, 1, 1], [], []>} : vector<32x32xf32>, vector<32x2xf32>, vector<32x2xf32> -> vector<32x2xf32>
    %164 = vector.broadcast %8 : vector<32x1xf32> to vector<32x2xf32>
    %165 = arith.addf %163, %164 : vector<32x2xf32>
    %cst_75 = arith.constant 0.000000e+00 : f32
    %166 = vector.broadcast %cst_75 : f32 to vector<32x2xf32>
    %167 = arith.maximumf %165, %166 : vector<32x2xf32>
    %cst_76 = arith.constant dense<0.000000e+00> : vector<32x2xf32>
    %168 = tpu.matmul %2, %167, %cst_76 {dimension_numbers = #tpu.dot_dimension_numbers<[1], [0], [0], [1], [0, 0, 1, 1], [], []>} : vector<32x32xf32>, vector<32x2xf32>, vector<32x2xf32> -> vector<32x2xf32>
    %169 = vector.broadcast %9 : vector<32x1xf32> to vector<32x2xf32>
    %170 = arith.addf %168, %169 : vector<32x2xf32>
    %171 = vector.broadcast %157 : vector<1x2xf32> to vector<32x2xf32>
    %172 = arith.mulf %170, %171 : vector<32x2xf32>
    %173 = arith.addf %153, %172 : vector<32x2xf32>
    %174 = arith.addf %154, %157 : vector<1x2xf32>
    %175 = vector.broadcast %174 : vector<1x2xf32> to vector<32x2xf32>
    %176 = arith.divf %173, %175 : vector<32x2xf32>
    %cst_77 = arith.constant dense<0.000000e+00> : vector<32x2xf32>
    %177 = tpu.matmul %3, %176, %cst_77 {dimension_numbers = #tpu.dot_dimension_numbers<[1], [0], [0], [1], [0, 0, 1, 1], [], []>} : vector<32x32xf32>, vector<32x2xf32>, vector<32x2xf32> -> vector<32x2xf32>
    %178 = vector.broadcast %10 : vector<32x1xf32> to vector<32x2xf32>
    %179 = arith.addf %177, %178 : vector<32x2xf32>
    %c0_78 = arith.constant 0 : index
    %c0_79 = arith.constant 0 : index
    %c0_80 = arith.constant 0 : index
    %180 = vector.load %arg2[%c0_78, %c0_79, %c0_80] : memref<8x8x2xf32, #tpu.memory_space<vmem>>, vector<1x8x2xf32>
    %181 = vector.shape_cast %180 : vector<1x8x2xf32> to vector<8x2xf32>
    %cst_81 = arith.constant dense<0.000000e+00> : vector<32x2xf32>
    %182 = tpu.matmul %4, %181, %cst_81 {dimension_numbers = #tpu.dot_dimension_numbers<[1], [0], [0], [1], [0, 0, 1, 1], [], []>} : vector<32x8xf32>, vector<8x2xf32>, vector<32x2xf32> -> vector<32x2xf32>
    %183 = arith.addf %179, %182 : vector<32x2xf32>
    %cst_82 = arith.constant 0.000000e+00 : f32
    %184 = vector.broadcast %cst_82 : f32 to vector<32x2xf32>
    %185 = arith.maximumf %183, %184 : vector<32x2xf32>
    %cst_83 = arith.constant dense<0.000000e+00> : vector<32x2xf32>
    %186 = tpu.matmul %5, %185, %cst_83 {dimension_numbers = #tpu.dot_dimension_numbers<[1], [0], [0], [1], [0, 0, 1, 1], [], []>} : vector<32x32xf32>, vector<32x2xf32>, vector<32x2xf32> -> vector<32x2xf32>
    %187 = vector.broadcast %11 : vector<32x1xf32> to vector<32x2xf32>
    %188 = arith.addf %186, %187 : vector<32x2xf32>
    %cst_84 = arith.constant 0.000000e+00 : f32
    %189 = vector.broadcast %cst_84 : f32 to vector<32x2xf32>
    %190 = arith.maximumf %188, %189 : vector<32x2xf32>
    %cst_85 = arith.constant dense<0.000000e+00> : vector<2x2xf32>
    %191 = tpu.matmul %6, %190, %cst_85 {dimension_numbers = #tpu.dot_dimension_numbers<[1], [0], [0], [1], [0, 0, 1, 1], [], []>} : vector<2x32xf32>, vector<32x2xf32>, vector<2x2xf32> -> vector<2x2xf32>
    %192 = vector.broadcast %12 : vector<2x1xf32> to vector<2x2xf32>
    %193 = arith.addf %191, %192 : vector<2x2xf32>
    %194 = vector.extract_strided_slice %193 {offsets = [0, 0], sizes = [1, 2], strides = [1, 1]} : vector<2x2xf32> to vector<1x2xf32>
    %195 = vector.extract_strided_slice %193 {offsets = [1, 0], sizes = [1, 2], strides = [1, 1]} : vector<2x2xf32> to vector<1x2xf32>
    %cst_86 = arith.constant 0.000000e+00 : f32
    %196 = vector.broadcast %cst_86 : f32 to vector<1x2xf32>
    %197 = arith.maximumf %195, %196 : vector<1x2xf32>
    %198 = vector.broadcast %cst_86 : f32 to vector<1x2xf32>
    %199 = arith.subf %195, %198 : vector<1x2xf32>
    %200 = arith.cmpf one, %199, %199 : vector<1x2xf32>
    %201 = vector.broadcast %cst_86 : f32 to vector<1x2xf32>
    %202 = arith.addf %195, %201 : vector<1x2xf32>
    %203 = math.absf %199 : vector<1x2xf32>
    %cst_87 = arith.constant 0.000000e+00 : f32
    %204 = vector.broadcast %cst_87 : f32 to vector<1x2xf32>
    %205 = arith.subf %204, %203 : vector<1x2xf32>
    %206 = math.exp %205 : vector<1x2xf32>
    %207 = math.log1p %206 : vector<1x2xf32>
    %208 = arith.addf %197, %207 : vector<1x2xf32>
    %209 = arith.select %200, %202, %208 : vector<1x2xi1>, vector<1x2xf32>
    %cst_88 = arith.constant 1.000000e-01 : f32
    %210 = vector.broadcast %cst_88 : f32 to vector<1x2xf32>
    %211 = arith.addf %209, %210 : vector<1x2xf32>
    %c1_89 = arith.constant 1 : index
    %c0_90 = arith.constant 0 : index
    %c0_91 = arith.constant 0 : index
    %212 = vector.load %arg2[%c1_89, %c0_90, %c0_91] : memref<8x8x2xf32, #tpu.memory_space<vmem>>, vector<1x8x2xf32>
    %213 = vector.shape_cast %212 : vector<1x8x2xf32> to vector<8x2xf32>
    %cst_92 = arith.constant dense<0.000000e+00> : vector<32x2xf32>
    %214 = tpu.matmul %4, %213, %cst_92 {dimension_numbers = #tpu.dot_dimension_numbers<[1], [0], [0], [1], [0, 0, 1, 1], [], []>} : vector<32x8xf32>, vector<8x2xf32>, vector<32x2xf32> -> vector<32x2xf32>
    %215 = arith.addf %179, %214 : vector<32x2xf32>
    %cst_93 = arith.constant 0.000000e+00 : f32
    %216 = vector.broadcast %cst_93 : f32 to vector<32x2xf32>
    %217 = arith.maximumf %215, %216 : vector<32x2xf32>
    %cst_94 = arith.constant dense<0.000000e+00> : vector<32x2xf32>
    %218 = tpu.matmul %5, %217, %cst_94 {dimension_numbers = #tpu.dot_dimension_numbers<[1], [0], [0], [1], [0, 0, 1, 1], [], []>} : vector<32x32xf32>, vector<32x2xf32>, vector<32x2xf32> -> vector<32x2xf32>
    %219 = vector.broadcast %11 : vector<32x1xf32> to vector<32x2xf32>
    %220 = arith.addf %218, %219 : vector<32x2xf32>
    %cst_95 = arith.constant 0.000000e+00 : f32
    %221 = vector.broadcast %cst_95 : f32 to vector<32x2xf32>
    %222 = arith.maximumf %220, %221 : vector<32x2xf32>
    %cst_96 = arith.constant dense<0.000000e+00> : vector<2x2xf32>
    %223 = tpu.matmul %6, %222, %cst_96 {dimension_numbers = #tpu.dot_dimension_numbers<[1], [0], [0], [1], [0, 0, 1, 1], [], []>} : vector<2x32xf32>, vector<32x2xf32>, vector<2x2xf32> -> vector<2x2xf32>
    %224 = vector.broadcast %12 : vector<2x1xf32> to vector<2x2xf32>
    %225 = arith.addf %223, %224 : vector<2x2xf32>
    %226 = vector.extract_strided_slice %225 {offsets = [0, 0], sizes = [1, 2], strides = [1, 1]} : vector<2x2xf32> to vector<1x2xf32>
    %227 = vector.extract_strided_slice %225 {offsets = [1, 0], sizes = [1, 2], strides = [1, 1]} : vector<2x2xf32> to vector<1x2xf32>
    %cst_97 = arith.constant 0.000000e+00 : f32
    %228 = vector.broadcast %cst_97 : f32 to vector<1x2xf32>
    %229 = arith.maximumf %227, %228 : vector<1x2xf32>
    %230 = vector.broadcast %cst_97 : f32 to vector<1x2xf32>
    %231 = arith.subf %227, %230 : vector<1x2xf32>
    %232 = arith.cmpf one, %231, %231 : vector<1x2xf32>
    %233 = vector.broadcast %cst_97 : f32 to vector<1x2xf32>
    %234 = arith.addf %227, %233 : vector<1x2xf32>
    %235 = math.absf %231 : vector<1x2xf32>
    %cst_98 = arith.constant 0.000000e+00 : f32
    %236 = vector.broadcast %cst_98 : f32 to vector<1x2xf32>
    %237 = arith.subf %236, %235 : vector<1x2xf32>
    %238 = math.exp %237 : vector<1x2xf32>
    %239 = math.log1p %238 : vector<1x2xf32>
    %240 = arith.addf %229, %239 : vector<1x2xf32>
    %241 = arith.select %232, %234, %240 : vector<1x2xi1>, vector<1x2xf32>
    %cst_99 = arith.constant 1.000000e-01 : f32
    %242 = vector.broadcast %cst_99 : f32 to vector<1x2xf32>
    %243 = arith.addf %241, %242 : vector<1x2xf32>
    %c2_100 = arith.constant 2 : index
    %c0_101 = arith.constant 0 : index
    %c0_102 = arith.constant 0 : index
    %244 = vector.load %arg2[%c2_100, %c0_101, %c0_102] : memref<8x8x2xf32, #tpu.memory_space<vmem>>, vector<1x8x2xf32>
    %245 = vector.shape_cast %244 : vector<1x8x2xf32> to vector<8x2xf32>
    %cst_103 = arith.constant dense<0.000000e+00> : vector<32x2xf32>
    %246 = tpu.matmul %4, %245, %cst_103 {dimension_numbers = #tpu.dot_dimension_numbers<[1], [0], [0], [1], [0, 0, 1, 1], [], []>} : vector<32x8xf32>, vector<8x2xf32>, vector<32x2xf32> -> vector<32x2xf32>
    %247 = arith.addf %179, %246 : vector<32x2xf32>
    %cst_104 = arith.constant 0.000000e+00 : f32
    %248 = vector.broadcast %cst_104 : f32 to vector<32x2xf32>
    %249 = arith.maximumf %247, %248 : vector<32x2xf32>
    %cst_105 = arith.constant dense<0.000000e+00> : vector<32x2xf32>
    %250 = tpu.matmul %5, %249, %cst_105 {dimension_numbers = #tpu.dot_dimension_numbers<[1], [0], [0], [1], [0, 0, 1, 1], [], []>} : vector<32x32xf32>, vector<32x2xf32>, vector<32x2xf32> -> vector<32x2xf32>
    %251 = vector.broadcast %11 : vector<32x1xf32> to vector<32x2xf32>
    %252 = arith.addf %250, %251 : vector<32x2xf32>
    %cst_106 = arith.constant 0.000000e+00 : f32
    %253 = vector.broadcast %cst_106 : f32 to vector<32x2xf32>
    %254 = arith.maximumf %252, %253 : vector<32x2xf32>
    %cst_107 = arith.constant dense<0.000000e+00> : vector<2x2xf32>
    %255 = tpu.matmul %6, %254, %cst_107 {dimension_numbers = #tpu.dot_dimension_numbers<[1], [0], [0], [1], [0, 0, 1, 1], [], []>} : vector<2x32xf32>, vector<32x2xf32>, vector<2x2xf32> -> vector<2x2xf32>
    %256 = vector.broadcast %12 : vector<2x1xf32> to vector<2x2xf32>
    %257 = arith.addf %255, %256 : vector<2x2xf32>
    %258 = vector.extract_strided_slice %257 {offsets = [0, 0], sizes = [1, 2], strides = [1, 1]} : vector<2x2xf32> to vector<1x2xf32>
    %259 = vector.extract_strided_slice %257 {offsets = [1, 0], sizes = [1, 2], strides = [1, 1]} : vector<2x2xf32> to vector<1x2xf32>
    %cst_108 = arith.constant 0.000000e+00 : f32
    %260 = vector.broadcast %cst_108 : f32 to vector<1x2xf32>
    %261 = arith.maximumf %259, %260 : vector<1x2xf32>
    %262 = vector.broadcast %cst_108 : f32 to vector<1x2xf32>
    %263 = arith.subf %259, %262 : vector<1x2xf32>
    %264 = arith.cmpf one, %263, %263 : vector<1x2xf32>
    %265 = vector.broadcast %cst_108 : f32 to vector<1x2xf32>
    %266 = arith.addf %259, %265 : vector<1x2xf32>
    %267 = math.absf %263 : vector<1x2xf32>
    %cst_109 = arith.constant 0.000000e+00 : f32
    %268 = vector.broadcast %cst_109 : f32 to vector<1x2xf32>
    %269 = arith.subf %268, %267 : vector<1x2xf32>
    %270 = math.exp %269 : vector<1x2xf32>
    %271 = math.log1p %270 : vector<1x2xf32>
    %272 = arith.addf %261, %271 : vector<1x2xf32>
    %273 = arith.select %264, %266, %272 : vector<1x2xi1>, vector<1x2xf32>
    %cst_110 = arith.constant 1.000000e-01 : f32
    %274 = vector.broadcast %cst_110 : f32 to vector<1x2xf32>
    %275 = arith.addf %273, %274 : vector<1x2xf32>
    %c3_111 = arith.constant 3 : index
    %c0_112 = arith.constant 0 : index
    %c0_113 = arith.constant 0 : index
    %276 = vector.load %arg2[%c3_111, %c0_112, %c0_113] : memref<8x8x2xf32, #tpu.memory_space<vmem>>, vector<1x8x2xf32>
    %277 = vector.shape_cast %276 : vector<1x8x2xf32> to vector<8x2xf32>
    %cst_114 = arith.constant dense<0.000000e+00> : vector<32x2xf32>
    %278 = tpu.matmul %4, %277, %cst_114 {dimension_numbers = #tpu.dot_dimension_numbers<[1], [0], [0], [1], [0, 0, 1, 1], [], []>} : vector<32x8xf32>, vector<8x2xf32>, vector<32x2xf32> -> vector<32x2xf32>
    %279 = arith.addf %179, %278 : vector<32x2xf32>
    %cst_115 = arith.constant 0.000000e+00 : f32
    %280 = vector.broadcast %cst_115 : f32 to vector<32x2xf32>
    %281 = arith.maximumf %279, %280 : vector<32x2xf32>
    %cst_116 = arith.constant dense<0.000000e+00> : vector<32x2xf32>
    %282 = tpu.matmul %5, %281, %cst_116 {dimension_numbers = #tpu.dot_dimension_numbers<[1], [0], [0], [1], [0, 0, 1, 1], [], []>} : vector<32x32xf32>, vector<32x2xf32>, vector<32x2xf32> -> vector<32x2xf32>
    %283 = vector.broadcast %11 : vector<32x1xf32> to vector<32x2xf32>
    %284 = arith.addf %282, %283 : vector<32x2xf32>
    %cst_117 = arith.constant 0.000000e+00 : f32
    %285 = vector.broadcast %cst_117 : f32 to vector<32x2xf32>
    %286 = arith.maximumf %284, %285 : vector<32x2xf32>
    %cst_118 = arith.constant dense<0.000000e+00> : vector<2x2xf32>
    %287 = tpu.matmul %6, %286, %cst_118 {dimension_numbers = #tpu.dot_dimension_numbers<[1], [0], [0], [1], [0, 0, 1, 1], [], []>} : vector<2x32xf32>, vector<32x2xf32>, vector<2x2xf32> -> vector<2x2xf32>
    %288 = vector.broadcast %12 : vector<2x1xf32> to vector<2x2xf32>
    %289 = arith.addf %287, %288 : vector<2x2xf32>
    %290 = vector.extract_strided_slice %289 {offsets = [0, 0], sizes = [1, 2], strides = [1, 1]} : vector<2x2xf32> to vector<1x2xf32>
    %291 = vector.extract_strided_slice %289 {offsets = [1, 0], sizes = [1, 2], strides = [1, 1]} : vector<2x2xf32> to vector<1x2xf32>
    %cst_119 = arith.constant 0.000000e+00 : f32
    %292 = vector.broadcast %cst_119 : f32 to vector<1x2xf32>
    %293 = arith.maximumf %291, %292 : vector<1x2xf32>
    %294 = vector.broadcast %cst_119 : f32 to vector<1x2xf32>
    %295 = arith.subf %291, %294 : vector<1x2xf32>
    %296 = arith.cmpf one, %295, %295 : vector<1x2xf32>
    %297 = vector.broadcast %cst_119 : f32 to vector<1x2xf32>
    %298 = arith.addf %291, %297 : vector<1x2xf32>
    %299 = math.absf %295 : vector<1x2xf32>
    %cst_120 = arith.constant 0.000000e+00 : f32
    %300 = vector.broadcast %cst_120 : f32 to vector<1x2xf32>
    %301 = arith.subf %300, %299 : vector<1x2xf32>
    %302 = math.exp %301 : vector<1x2xf32>
    %303 = math.log1p %302 : vector<1x2xf32>
    %304 = arith.addf %293, %303 : vector<1x2xf32>
    %305 = arith.select %296, %298, %304 : vector<1x2xi1>, vector<1x2xf32>
    %cst_121 = arith.constant 1.000000e-01 : f32
    %306 = vector.broadcast %cst_121 : f32 to vector<1x2xf32>
    %307 = arith.addf %305, %306 : vector<1x2xf32>
    %c4_122 = arith.constant 4 : index
    %c0_123 = arith.constant 0 : index
    %c0_124 = arith.constant 0 : index
    %308 = vector.load %arg2[%c4_122, %c0_123, %c0_124] : memref<8x8x2xf32, #tpu.memory_space<vmem>>, vector<1x8x2xf32>
    %309 = vector.shape_cast %308 : vector<1x8x2xf32> to vector<8x2xf32>
    %cst_125 = arith.constant dense<0.000000e+00> : vector<32x2xf32>
    %310 = tpu.matmul %4, %309, %cst_125 {dimension_numbers = #tpu.dot_dimension_numbers<[1], [0], [0], [1], [0, 0, 1, 1], [], []>} : vector<32x8xf32>, vector<8x2xf32>, vector<32x2xf32> -> vector<32x2xf32>
    %311 = arith.addf %179, %310 : vector<32x2xf32>
    %cst_126 = arith.constant 0.000000e+00 : f32
    %312 = vector.broadcast %cst_126 : f32 to vector<32x2xf32>
    %313 = arith.maximumf %311, %312 : vector<32x2xf32>
    %cst_127 = arith.constant dense<0.000000e+00> : vector<32x2xf32>
    %314 = tpu.matmul %5, %313, %cst_127 {dimension_numbers = #tpu.dot_dimension_numbers<[1], [0], [0], [1], [0, 0, 1, 1], [], []>} : vector<32x32xf32>, vector<32x2xf32>, vector<32x2xf32> -> vector<32x2xf32>
    %315 = vector.broadcast %11 : vector<32x1xf32> to vector<32x2xf32>
    %316 = arith.addf %314, %315 : vector<32x2xf32>
    %cst_128 = arith.constant 0.000000e+00 : f32
    %317 = vector.broadcast %cst_128 : f32 to vector<32x2xf32>
    %318 = arith.maximumf %316, %317 : vector<32x2xf32>
    %cst_129 = arith.constant dense<0.000000e+00> : vector<2x2xf32>
    %319 = tpu.matmul %6, %318, %cst_129 {dimension_numbers = #tpu.dot_dimension_numbers<[1], [0], [0], [1], [0, 0, 1, 1], [], []>} : vector<2x32xf32>, vector<32x2xf32>, vector<2x2xf32> -> vector<2x2xf32>
    %320 = vector.broadcast %12 : vector<2x1xf32> to vector<2x2xf32>
    %321 = arith.addf %319, %320 : vector<2x2xf32>
    %322 = vector.extract_strided_slice %321 {offsets = [0, 0], sizes = [1, 2], strides = [1, 1]} : vector<2x2xf32> to vector<1x2xf32>
    %323 = vector.extract_strided_slice %321 {offsets = [1, 0], sizes = [1, 2], strides = [1, 1]} : vector<2x2xf32> to vector<1x2xf32>
    %cst_130 = arith.constant 0.000000e+00 : f32
    %324 = vector.broadcast %cst_130 : f32 to vector<1x2xf32>
    %325 = arith.maximumf %323, %324 : vector<1x2xf32>
    %326 = vector.broadcast %cst_130 : f32 to vector<1x2xf32>
    %327 = arith.subf %323, %326 : vector<1x2xf32>
    %328 = arith.cmpf one, %327, %327 : vector<1x2xf32>
    %329 = vector.broadcast %cst_130 : f32 to vector<1x2xf32>
    %330 = arith.addf %323, %329 : vector<1x2xf32>
    %331 = math.absf %327 : vector<1x2xf32>
    %cst_131 = arith.constant 0.000000e+00 : f32
    %332 = vector.broadcast %cst_131 : f32 to vector<1x2xf32>
    %333 = arith.subf %332, %331 : vector<1x2xf32>
    %334 = math.exp %333 : vector<1x2xf32>
    %335 = math.log1p %334 : vector<1x2xf32>
    %336 = arith.addf %325, %335 : vector<1x2xf32>
    %337 = arith.select %328, %330, %336 : vector<1x2xi1>, vector<1x2xf32>
    %cst_132 = arith.constant 1.000000e-01 : f32
    %338 = vector.broadcast %cst_132 : f32 to vector<1x2xf32>
    %339 = arith.addf %337, %338 : vector<1x2xf32>
    %c5_133 = arith.constant 5 : index
    %c0_134 = arith.constant 0 : index
    %c0_135 = arith.constant 0 : index
    %340 = vector.load %arg2[%c5_133, %c0_134, %c0_135] : memref<8x8x2xf32, #tpu.memory_space<vmem>>, vector<1x8x2xf32>
    %341 = vector.shape_cast %340 : vector<1x8x2xf32> to vector<8x2xf32>
    %cst_136 = arith.constant dense<0.000000e+00> : vector<32x2xf32>
    %342 = tpu.matmul %4, %341, %cst_136 {dimension_numbers = #tpu.dot_dimension_numbers<[1], [0], [0], [1], [0, 0, 1, 1], [], []>} : vector<32x8xf32>, vector<8x2xf32>, vector<32x2xf32> -> vector<32x2xf32>
    %343 = arith.addf %179, %342 : vector<32x2xf32>
    %cst_137 = arith.constant 0.000000e+00 : f32
    %344 = vector.broadcast %cst_137 : f32 to vector<32x2xf32>
    %345 = arith.maximumf %343, %344 : vector<32x2xf32>
    %cst_138 = arith.constant dense<0.000000e+00> : vector<32x2xf32>
    %346 = tpu.matmul %5, %345, %cst_138 {dimension_numbers = #tpu.dot_dimension_numbers<[1], [0], [0], [1], [0, 0, 1, 1], [], []>} : vector<32x32xf32>, vector<32x2xf32>, vector<32x2xf32> -> vector<32x2xf32>
    %347 = vector.broadcast %11 : vector<32x1xf32> to vector<32x2xf32>
    %348 = arith.addf %346, %347 : vector<32x2xf32>
    %cst_139 = arith.constant 0.000000e+00 : f32
    %349 = vector.broadcast %cst_139 : f32 to vector<32x2xf32>
    %350 = arith.maximumf %348, %349 : vector<32x2xf32>
    %cst_140 = arith.constant dense<0.000000e+00> : vector<2x2xf32>
    %351 = tpu.matmul %6, %350, %cst_140 {dimension_numbers = #tpu.dot_dimension_numbers<[1], [0], [0], [1], [0, 0, 1, 1], [], []>} : vector<2x32xf32>, vector<32x2xf32>, vector<2x2xf32> -> vector<2x2xf32>
    %352 = vector.broadcast %12 : vector<2x1xf32> to vector<2x2xf32>
    %353 = arith.addf %351, %352 : vector<2x2xf32>
    %354 = vector.extract_strided_slice %353 {offsets = [0, 0], sizes = [1, 2], strides = [1, 1]} : vector<2x2xf32> to vector<1x2xf32>
    %355 = vector.extract_strided_slice %353 {offsets = [1, 0], sizes = [1, 2], strides = [1, 1]} : vector<2x2xf32> to vector<1x2xf32>
    %cst_141 = arith.constant 0.000000e+00 : f32
    %356 = vector.broadcast %cst_141 : f32 to vector<1x2xf32>
    %357 = arith.maximumf %355, %356 : vector<1x2xf32>
    %358 = vector.broadcast %cst_141 : f32 to vector<1x2xf32>
    %359 = arith.subf %355, %358 : vector<1x2xf32>
    %360 = arith.cmpf one, %359, %359 : vector<1x2xf32>
    %361 = vector.broadcast %cst_141 : f32 to vector<1x2xf32>
    %362 = arith.addf %355, %361 : vector<1x2xf32>
    %363 = math.absf %359 : vector<1x2xf32>
    %cst_142 = arith.constant 0.000000e+00 : f32
    %364 = vector.broadcast %cst_142 : f32 to vector<1x2xf32>
    %365 = arith.subf %364, %363 : vector<1x2xf32>
    %366 = math.exp %365 : vector<1x2xf32>
    %367 = math.log1p %366 : vector<1x2xf32>
    %368 = arith.addf %357, %367 : vector<1x2xf32>
    %369 = arith.select %360, %362, %368 : vector<1x2xi1>, vector<1x2xf32>
    %cst_143 = arith.constant 1.000000e-01 : f32
    %370 = vector.broadcast %cst_143 : f32 to vector<1x2xf32>
    %371 = arith.addf %369, %370 : vector<1x2xf32>
    %c6_144 = arith.constant 6 : index
    %c0_145 = arith.constant 0 : index
    %c0_146 = arith.constant 0 : index
    %372 = vector.load %arg2[%c6_144, %c0_145, %c0_146] : memref<8x8x2xf32, #tpu.memory_space<vmem>>, vector<1x8x2xf32>
    %373 = vector.shape_cast %372 : vector<1x8x2xf32> to vector<8x2xf32>
    %cst_147 = arith.constant dense<0.000000e+00> : vector<32x2xf32>
    %374 = tpu.matmul %4, %373, %cst_147 {dimension_numbers = #tpu.dot_dimension_numbers<[1], [0], [0], [1], [0, 0, 1, 1], [], []>} : vector<32x8xf32>, vector<8x2xf32>, vector<32x2xf32> -> vector<32x2xf32>
    %375 = arith.addf %179, %374 : vector<32x2xf32>
    %cst_148 = arith.constant 0.000000e+00 : f32
    %376 = vector.broadcast %cst_148 : f32 to vector<32x2xf32>
    %377 = arith.maximumf %375, %376 : vector<32x2xf32>
    %cst_149 = arith.constant dense<0.000000e+00> : vector<32x2xf32>
    %378 = tpu.matmul %5, %377, %cst_149 {dimension_numbers = #tpu.dot_dimension_numbers<[1], [0], [0], [1], [0, 0, 1, 1], [], []>} : vector<32x32xf32>, vector<32x2xf32>, vector<32x2xf32> -> vector<32x2xf32>
    %379 = vector.broadcast %11 : vector<32x1xf32> to vector<32x2xf32>
    %380 = arith.addf %378, %379 : vector<32x2xf32>
    %cst_150 = arith.constant 0.000000e+00 : f32
    %381 = vector.broadcast %cst_150 : f32 to vector<32x2xf32>
    %382 = arith.maximumf %380, %381 : vector<32x2xf32>
    %cst_151 = arith.constant dense<0.000000e+00> : vector<2x2xf32>
    %383 = tpu.matmul %6, %382, %cst_151 {dimension_numbers = #tpu.dot_dimension_numbers<[1], [0], [0], [1], [0, 0, 1, 1], [], []>} : vector<2x32xf32>, vector<32x2xf32>, vector<2x2xf32> -> vector<2x2xf32>
    %384 = vector.broadcast %12 : vector<2x1xf32> to vector<2x2xf32>
    %385 = arith.addf %383, %384 : vector<2x2xf32>
    %386 = vector.extract_strided_slice %385 {offsets = [0, 0], sizes = [1, 2], strides = [1, 1]} : vector<2x2xf32> to vector<1x2xf32>
    %387 = vector.extract_strided_slice %385 {offsets = [1, 0], sizes = [1, 2], strides = [1, 1]} : vector<2x2xf32> to vector<1x2xf32>
    %cst_152 = arith.constant 0.000000e+00 : f32
    %388 = vector.broadcast %cst_152 : f32 to vector<1x2xf32>
    %389 = arith.maximumf %387, %388 : vector<1x2xf32>
    %390 = vector.broadcast %cst_152 : f32 to vector<1x2xf32>
    %391 = arith.subf %387, %390 : vector<1x2xf32>
    %392 = arith.cmpf one, %391, %391 : vector<1x2xf32>
    %393 = vector.broadcast %cst_152 : f32 to vector<1x2xf32>
    %394 = arith.addf %387, %393 : vector<1x2xf32>
    %395 = math.absf %391 : vector<1x2xf32>
    %cst_153 = arith.constant 0.000000e+00 : f32
    %396 = vector.broadcast %cst_153 : f32 to vector<1x2xf32>
    %397 = arith.subf %396, %395 : vector<1x2xf32>
    %398 = math.exp %397 : vector<1x2xf32>
    %399 = math.log1p %398 : vector<1x2xf32>
    %400 = arith.addf %389, %399 : vector<1x2xf32>
    %401 = arith.select %392, %394, %400 : vector<1x2xi1>, vector<1x2xf32>
    %cst_154 = arith.constant 1.000000e-01 : f32
    %402 = vector.broadcast %cst_154 : f32 to vector<1x2xf32>
    %403 = arith.addf %401, %402 : vector<1x2xf32>
    %c7_155 = arith.constant 7 : index
    %c0_156 = arith.constant 0 : index
    %c0_157 = arith.constant 0 : index
    %404 = vector.load %arg2[%c7_155, %c0_156, %c0_157] : memref<8x8x2xf32, #tpu.memory_space<vmem>>, vector<1x8x2xf32>
    %405 = vector.shape_cast %404 : vector<1x8x2xf32> to vector<8x2xf32>
    %cst_158 = arith.constant dense<0.000000e+00> : vector<32x2xf32>
    %406 = tpu.matmul %4, %405, %cst_158 {dimension_numbers = #tpu.dot_dimension_numbers<[1], [0], [0], [1], [0, 0, 1, 1], [], []>} : vector<32x8xf32>, vector<8x2xf32>, vector<32x2xf32> -> vector<32x2xf32>
    %407 = arith.addf %179, %406 : vector<32x2xf32>
    %cst_159 = arith.constant 0.000000e+00 : f32
    %408 = vector.broadcast %cst_159 : f32 to vector<32x2xf32>
    %409 = arith.maximumf %407, %408 : vector<32x2xf32>
    %cst_160 = arith.constant dense<0.000000e+00> : vector<32x2xf32>
    %410 = tpu.matmul %5, %409, %cst_160 {dimension_numbers = #tpu.dot_dimension_numbers<[1], [0], [0], [1], [0, 0, 1, 1], [], []>} : vector<32x32xf32>, vector<32x2xf32>, vector<32x2xf32> -> vector<32x2xf32>
    %411 = vector.broadcast %11 : vector<32x1xf32> to vector<32x2xf32>
    %412 = arith.addf %410, %411 : vector<32x2xf32>
    %cst_161 = arith.constant 0.000000e+00 : f32
    %413 = vector.broadcast %cst_161 : f32 to vector<32x2xf32>
    %414 = arith.maximumf %412, %413 : vector<32x2xf32>
    %cst_162 = arith.constant dense<0.000000e+00> : vector<2x2xf32>
    %415 = tpu.matmul %6, %414, %cst_162 {dimension_numbers = #tpu.dot_dimension_numbers<[1], [0], [0], [1], [0, 0, 1, 1], [], []>} : vector<2x32xf32>, vector<32x2xf32>, vector<2x2xf32> -> vector<2x2xf32>
    %416 = vector.broadcast %12 : vector<2x1xf32> to vector<2x2xf32>
    %417 = arith.addf %415, %416 : vector<2x2xf32>
    %418 = vector.extract_strided_slice %417 {offsets = [0, 0], sizes = [1, 2], strides = [1, 1]} : vector<2x2xf32> to vector<1x2xf32>
    %419 = vector.extract_strided_slice %417 {offsets = [1, 0], sizes = [1, 2], strides = [1, 1]} : vector<2x2xf32> to vector<1x2xf32>
    %cst_163 = arith.constant 0.000000e+00 : f32
    %420 = vector.broadcast %cst_163 : f32 to vector<1x2xf32>
    %421 = arith.maximumf %419, %420 : vector<1x2xf32>
    %422 = vector.broadcast %cst_163 : f32 to vector<1x2xf32>
    %423 = arith.subf %419, %422 : vector<1x2xf32>
    %424 = arith.cmpf one, %423, %423 : vector<1x2xf32>
    %425 = vector.broadcast %cst_163 : f32 to vector<1x2xf32>
    %426 = arith.addf %419, %425 : vector<1x2xf32>
    %427 = math.absf %423 : vector<1x2xf32>
    %cst_164 = arith.constant 0.000000e+00 : f32
    %428 = vector.broadcast %cst_164 : f32 to vector<1x2xf32>
    %429 = arith.subf %428, %427 : vector<1x2xf32>
    %430 = math.exp %429 : vector<1x2xf32>
    %431 = math.log1p %430 : vector<1x2xf32>
    %432 = arith.addf %421, %431 : vector<1x2xf32>
    %433 = arith.select %424, %426, %432 : vector<1x2xi1>, vector<1x2xf32>
    %cst_165 = arith.constant 1.000000e-01 : f32
    %434 = vector.broadcast %cst_165 : f32 to vector<1x2xf32>
    %435 = arith.addf %433, %434 : vector<1x2xf32>
    %436 = tpu.concatenate %194, %226, %258, %290, %322, %354, %386, %418, %211, %243, %275, %307, %339, %371, %403, %435 in 0 : vector<1x2xf32>, vector<1x2xf32>, vector<1x2xf32>, vector<1x2xf32>, vector<1x2xf32>, vector<1x2xf32>, vector<1x2xf32>, vector<1x2xf32>, vector<1x2xf32>, vector<1x2xf32>, vector<1x2xf32>, vector<1x2xf32>, vector<1x2xf32>, vector<1x2xf32>, vector<1x2xf32>, vector<1x2xf32> -> vector<16x2xf32>
    %c0_166 = arith.constant 0 : index
    %c0_167 = arith.constant 0 : index
    %437 = vector.load %arg5[%c0_166, %c0_167] : memref<16x2xf32, #tpu.memory_space<vmem>>, vector<16x2xf32>
    tpu.vector_store %arg5[%c0_166, %c0_167], %436 {strides = array<i32>} : memref<16x2xf32, #tpu.memory_space<vmem>>, vector<16x2xf32>,
    return
  }
  func.func @transform_0(%arg0: i32) -> (i32, i32, i32) {
    %c0_i32 = arith.constant 0 : i32
    %c0_i32_0 = arith.constant 0 : i32
    %c0_i32_1 = arith.constant 0 : i32
    return %c0_i32, %c0_i32_0, %arg0 : i32, i32, i32
  }
  func.func @transform_1(%arg0: i32) -> (i32, i32, i32) {
    %c0_i32 = arith.constant 0 : i32
    %c0_i32_0 = arith.constant 0 : i32
    %c0_i32_1 = arith.constant 0 : i32
    return %c0_i32, %c0_i32_0, %arg0 : i32, i32, i32
  }
  func.func @transform_2(%arg0: i32) -> (i32, i32) {
    %c0_i32 = arith.constant 0 : i32
    %c0_i32_0 = arith.constant 0 : i32
    %c0_i32_1 = arith.constant 0 : i32
    return %c0_i32, %c0_i32_0 : i32, i32
  }
  func.func @transform_3(%arg0: i32) -> (i32, i32) {
    %c0_i32 = arith.constant 0 : i32
    %c0_i32_0 = arith.constant 0 : i32
    %c0_i32_1 = arith.constant 0 : i32
    return %c0_i32, %c0_i32_0 : i32, i32
  }
  func.func @transform_4(%arg0: i32) -> (i32, i32) {
    %c0_i32 = arith.constant 0 : i32
    %c0_i32_0 = arith.constant 0 : i32
    return %c0_i32, %arg0 : i32, i32
  }
}

</mosaic_0001>

<llo_original>
// kernel: _cnp_forward_impl.1
$region0: #{_cnp_forward_impl.1}
  #allocation0 [shape = 'u32[]', space=smem, size = 0x4, offset = 0x4, fixed_abs, tag = 'smem constant byte address 0x4 - core index']
  #allocation1 [shape = 'u32[72,128]{1,0:T(1,128)}', space=vmem, size = 0x9000, scoped, tag = 'internal scratch']
  %s0 = inlined_call_operand.vmem [shape: f32[8,8,2], index: 0, kind: input, shape index: {}]
  %s1 = inlined_call_operand.vmem [shape: f32[8,8,2], index: 1, kind: input, shape index: {}]
  %s2 = inlined_call_operand.vmem [shape: f32[224,32], index: 2, kind: input, shape index: {}]
  %s3 = inlined_call_operand.vmem [shape: f32[32,8], index: 3, kind: input, shape index: {}]
  %s4 = inlined_call_operand.vmem [shape: f32[16,2], index: 4, kind: output, shape index: {}]
  %s5 = sld [smem:[#allocation0]]
  $region26: #{_cnp_forward_impl.1} parent=0
    _
  %s7 = ssub.s32 1, %s5
  %s8 = scalar_select 0, %s7, %s5
  // Predicated region
  $region2: #{_cnp_forward_impl.1} parent=0 // pred_check
    _
  $region3: #{_cnp_forward_impl.1} parent=0 // pred_check_branch
    %10 = sbr.rel (0) target = $region5
  $region4: #{_cnp_forward_impl.1} parent=0 // pred_region
    _
  $region5: #{_cnp_forward_impl.1} parent=0 // pred_fallthru
    _
  // Predicated region
  $region6: #{_cnp_forward_impl.1} parent=0 // pred_check
    _
  $region7: #{_cnp_forward_impl.1} parent=0 // pred_check_branch
    %12 = sbr.rel (0) target = $region9
  $region8: #{_cnp_forward_impl.1} parent=0 // pred_region
    _
  $region9: #{_cnp_forward_impl.1} parent=0 // pred_fallthru
    _
  // Predicated region
  $region10: #{_cnp_forward_impl.1} parent=0 // pred_check
    _
  $region11: #{_cnp_forward_impl.1} parent=0 // pred_check_branch
    %14 = sbr.rel (0) target = $region13
  $region12: #{_cnp_forward_impl.1} parent=0 // pred_region
    _
  $region13: #{_cnp_forward_impl.1} parent=0 // pred_fallthru
    _
  // Predicated region
  $region14: #{_cnp_forward_impl.1} parent=0 // pred_check
    _
  $region15: #{_cnp_forward_impl.1} parent=0 // pred_check_branch
    %16 = sbr.rel (0) target = $region17
  $region16: #{_cnp_forward_impl.1} parent=0 // pred_region
    _
  $region17: #{_cnp_forward_impl.1} parent=0 // pred_fallthru
    _
  %v17 = vld [vmem:[%s2] sm:$0xff]
  %v18 = vld [vmem:[%s2 + $0x8] sm:$0xff]
  %v19 = vld [vmem:[%s2 + $0x10] sm:$0xff]
  %v20 = vld [vmem:[%s2 + $0x18] sm:$0xff]
  %v21 = vld [vmem:[%s2 + $0x20] sm:$0xff]
  %v22 = vld [vmem:[%s2 + $0x28] sm:$0xff]
  %v23 = vld [vmem:[%s2 + $0x30] sm:$0xff]
  %v24 = vld [vmem:[%s2 + $0x38] sm:$0xff]
  %v25 = vld [vmem:[%s2 + $0x40] sm:$0xff]
  %v26 = vld [vmem:[%s2 + $0x48] sm:$0xff]
  %v27 = vld [vmem:[%s2 + $0x50] sm:$0xff]
  %v28 = vld [vmem:[%s2 + $0x58] sm:$0xff]
  %v29 = vld [vmem:[%s2 + $0x60] sm:$0xff]
  %v30 = vld [vmem:[%s2 + $0x68] sm:$0xff]
  %v31 = vld [vmem:[%s2 + $0x70] sm:$0xff]
  %v32 = vld [vmem:[%s2 + $0x78] sm:$0xff]
  %v33 = vld [vmem:[%s2 + $0x80] sm:$0xff]
  %v34 = vld [vmem:[%s2 + $0x88] sm:$0xff]
  %v35 = vld [vmem:[%s2 + $0x90] sm:$0xff]
  %v36 = vld [vmem:[%s2 + $0x98] sm:$0xff]
  %v37 = vld [vmem:[%s2 + $0xa0] sm:$0xff]
  %v38 = vld [vmem:[%s2 + $0xa8] sm:$0xff]
  %v39 = vld [vmem:[%s2 + $0xb0] sm:$0xff]
  %v40 = vld [vmem:[%s2 + $0xb8] sm:$0xff]
  %v41 = vld [vmem:[%s2 + $0xc0] sm:$0x3]
  %v42 = vld [vmem:[%s3] sm:$0xff]
  %v43 = vld [vmem:[%s3 + $0x8] sm:$0xff]
  %v44 = vld [vmem:[%s3 + $0x10] sm:$0xff]
  %v45 = vld [vmem:[%s3 + $0x18] sm:$0xff]
  %v46 = vld [vmem:[%s3] sm:$0x3]
  %v47 = vld [vmem:[%s0] sm:$0xff]
  %49 = vset.pattern.permute.xlu0 0
  %50 = vperm.xlu0 %49, %v42
  %v51 = vpop.permute.xlu0 %50
  %54 = vset.pattern.permute.xlu0 0
  %55 = vperm.xlu0 %54, %v43
  %v56 = vpop.permute.xlu0 %55
  %59 = vset.pattern.permute.xlu0 0
  %60 = vperm.xlu0 %59, %v44
  %v61 = vpop.permute.xlu0 %60
  %64 = vset.pattern.permute.xlu0 0
  %65 = vperm.xlu0 %64, %v45
  %v66 = vpop.permute.xlu0 %65
  %vm68 = vcmask 64512
  %v70 = vsel %vm68, %v17, 0
  %v73 = vsel %vm68, %v18, 0
  %v76 = vsel %vm68, %v19, 0
  %v79 = vsel %vm68, %v20, 0
  %81 = vmatpush.msra.mxu0 0.0
  %82 = vmatpush.msra.mxu0 0.0
  %83 = vmatpush.msra.mxu0 0.0
  %84 = vmatpush.msra.mxu0 0.0
  %85 = vmatpush.msra.mxu0 0.0
  %86 = vmatpush.msra.mxu0 0.0
  %87 = vmatpush.msra.mxu0 0.0
  %88 = vmatpush.msra.mxu0 0.0
  %89 = vmatpush.msra.mxu0 0.0
  %90 = vmatpush.msra.mxu0 0.0
  %91 = vmatpush.msra.mxu0 0.0
  %92 = vmatpush.msra.mxu0 0.0
  %93 = vmatpush.msra.mxu0 0.0
  %94 = vmatpush.msra.mxu0 0.0
  %95 = vmatpush.msra.mxu0 0.0
  %96 = vmatpush.msra.mxu0 %v47
  %97 = vmatmul.f32.gmra.mxu0 %v70
  %v98 = vpop.f32.mrf.mxu0
  %v99 = vadd.f32 %v51, %v98
  %100 = vmatmul.f32.gmra.mxu0 %v73
  %v101 = vpop.f32.mrf.mxu0
  %v102 = vadd.f32 %v56, %v101
  %103 = vmatmul.f32.gmra.mxu0 %v76
  %v104 = vpop.f32.mrf.mxu0
  %v105 = vadd.f32 %v61, %v104
  %106 = vmatmul.f32.gmra.mxu0 %v79
  %v107 = vpop.f32.mrf.mxu0
  %v108 = vadd.f32 %v66, %v107
  %109 = vdwg.mxu0
  %v110 = vmax.f32 %v99, 0.0
  %v111 = vmax.f32 %v102, 0.0
  %v112 = vmax.f32 %v105, 0.0
  %v113 = vmax.f32 %v108, 0.0
  %114 = vset.pattern.permute.xlu0 1
  %115 = vperm.xlu0 %114, %v42
  %v116 = vpop.permute.xlu0 %115
  %118 = vset.pattern.permute.xlu0 1
  %119 = vperm.xlu0 %118, %v43
  %v120 = vpop.permute.xlu0 %119
  %122 = vset.pattern.permute.xlu0 1
  %123 = vperm.xlu0 %122, %v44
  %v124 = vpop.permute.xlu0 %123
  %126 = vset.pattern.permute.xlu0 1
  %127 = vperm.xlu0 %126, %v45
  %v128 = vpop.permute.xlu0 %127
  %vm130 = vcmask 261120
  %v132 = vsel %vm130, %v21, 0
  %v135 = vsel %vm130, %v22, 0
  %v138 = vsel %vm130, %v23, 0
  %v141 = vsel %vm130, %v24, 0
  %143 = vmatpush.msra.mxu0 0.0
  %144 = vmatpush.msra.mxu0 0.0
  %145 = vmatpush.msra.mxu0 0.0
  %146 = vmatpush.msra.mxu0 0.0
  %147 = vmatpush.msra.mxu0 0.0
  %148 = vmatpush.msra.mxu0 0.0
  %149 = vmatpush.msra.mxu0 0.0
  %150 = vmatpush.msra.mxu0 0.0
  %151 = vmatpush.msra.mxu0 0.0
  %152 = vmatpush.msra.mxu0 0.0
  %153 = vmatpush.msra.mxu0 0.0
  %154 = vmatpush.msra.mxu0 0.0
  %155 = vmatpush.msra.mxu0 %v113
  %156 = vmatpush.msra.mxu0 %v112
  %157 = vmatpush.msra.mxu0 %v111
  %158 = vmatpush.msra.mxu0 %v110
  %159 = vmatmul.f32.gmra.mxu0 %v132
  %v160 = vpop.f32.mrf.mxu0
  %v161 = vadd.f32 %v116, %v160
  %162 = vmatmul.f32.gmra.mxu0 %v135
  %v163 = vpop.f32.mrf.mxu0
  %v164 = vadd.f32 %v120, %v163
  %165 = vmatmul.f32.gmra.mxu0 %v138
  %v166 = vpop.f32.mrf.mxu0
  %v167 = vadd.f32 %v124, %v166
  %168 = vmatmul.f32.gmra.mxu0 %v141
  %v169 = vpop.f32.mrf.mxu0
  %v170 = vadd.f32 %v128, %v169
  %171 = vdwg.mxu0
  %v172 = vmax.f32 %v161, 0.0
  %v173 = vmax.f32 %v164, 0.0
  %v174 = vmax.f32 %v167, 0.0
  %v175 = vmax.f32 %v170, 0.0
  %176 = vset.pattern.permute.xlu0 2
  %177 = vperm.xlu0 %176, %v42
  %v178 = vpop.permute.xlu0 %177
  %180 = vset.pattern.permute.xlu0 2
  %181 = vperm.xlu0 %180, %v43
  %v182 = vpop.permute.xlu0 %181
  %184 = vset.pattern.permute.xlu0 2
  %185 = vperm.xlu0 %184, %v44
  %v186 = vpop.permute.xlu0 %185
  %188 = vset.pattern.permute.xlu0 2
  %189 = vperm.xlu0 %188, %v45
  %v190 = vpop.permute.xlu0 %189
  %v193 = vsel %vm130, %v25, 0
  %v196 = vsel %vm130, %v26, 0
  %v199 = vsel %vm130, %v27, 0
  %v202 = vsel %vm130, %v28, 0
  %204 = vmatpush.msra.mxu0 0.0
  %205 = vmatpush.msra.mxu0 0.0
  %206 = vmatpush.msra.mxu0 0.0
  %207 = vmatpush.msra.mxu0 0.0
  %208 = vmatpush.msra.mxu0 0.0
  %209 = vmatpush.msra.mxu0 0.0
  %210 = vmatpush.msra.mxu0 0.0
  %211 = vmatpush.msra.mxu0 0.0
  %212 = vmatpush.msra.mxu0 0.0
  %213 = vmatpush.msra.mxu0 0.0
  %214 = vmatpush.msra.mxu0 0.0
  %215 = vmatpush.msra.mxu0 0.0
  %216 = vmatpush.msra.mxu0 %v175
  %217 = vmatpush.msra.mxu0 %v174
  %218 = vmatpush.msra.mxu0 %v173
  %219 = vmatpush.msra.mxu0 %v172
  %220 = vmatmul.f32.gmra.mxu0 %v193
  %v221 = vpop.f32.mrf.mxu0
  %v222 = vadd.f32 %v178, %v221
  %223 = vmatmul.f32.gmra.mxu0 %v196
  %v224 = vpop.f32.mrf.mxu0
  %v225 = vadd.f32 %v182, %v224
  %226 = vmatmul.f32.gmra.mxu0 %v199
  %v227 = vpop.f32.mrf.mxu0
  %v228 = vadd.f32 %v186, %v227
  %229 = vmatmul.f32.gmra.mxu0 %v202
  %v230 = vpop.f32.mrf.mxu0
  %v231 = vadd.f32 %v190, %v230
  %232 = vdwg.mxu0
  %v233 = vperm.slane %v47, 3
  %v234 = vmul.f32 %v222, %v233
  %v235 = vmul.f32 %v225, %v233
  %v236 = vmul.f32 %v228, %v233
  %v237 = vmul.f32 %v231, %v233
  %v238 = vadd.f32 %v234, 0.0
  %v239 = vadd.f32 %v235, 0.0
  %v240 = vadd.f32 %v236, 0.0
  %v241 = vadd.f32 %v237, 0.0
  %v242 = vadd.f32 %v47, 0.0
  %s243 = scalar_lea.vmem %s0, 8
  %v244 = vld [vmem:[%s243] sm:$0xff]
  %245 = vmatpush.msra.mxu0 0.0
  %246 = vmatpush.msra.mxu0 0.0
  %247 = vmatpush.msra.mxu0 0.0
  %248 = vmatpush.msra.mxu0 0.0
  %249 = vmatpush.msra.mxu0 0.0
  %250 = vmatpush.msra.mxu0 0.0
  %251 = vmatpush.msra.mxu0 0.0
  %252 = vmatpush.msra.mxu0 0.0
  %253 = vmatpush.msra.mxu0 0.0
  %254 = vmatpush.msra.mxu0 0.0
  %255 = vmatpush.msra.mxu0 0.0
  %256 = vmatpush.msra.mxu0 0.0
  %257 = vmatpush.msra.mxu0 0.0
  %258 = vmatpush.msra.mxu0 0.0
  %259 = vmatpush.msra.mxu0 0.0
  %260 = vmatpush.msra.mxu0 %v244
  %261 = vmatmul.f32.gmra.mxu0 %v70
  %v262 = vpop.f32.mrf.mxu0
  %v263 = vadd.f32 %v51, %v262
  %264 = vmatmul.f32.gmra.mxu0 %v73
  %v265 = vpop.f32.mrf.mxu0
  %v266 = vadd.f32 %v56, %v265
  %267 = vmatmul.f32.gmra.mxu0 %v76
  %v268 = vpop.f32.mrf.mxu0
  %v269 = vadd.f32 %v61, %v268
  %270 = vmatmul.f32.gmra.mxu0 %v79
  %v271 = vpop.f32.mrf.mxu0
  %v272 = vadd.f32 %v66, %v271
  %273 = vdwg.mxu0
  %v274 = vmax.f32 %v263, 0.0
  %v275 = vmax.f32 %v266, 0.0
  %v276 = vmax.f32 %v269, 0.0
  %v277 = vmax.f32 %v272, 0.0
  %278 = vmatpush.msra.mxu0 0.0
  %279 = vmatpush.msra.mxu0 0.0
  %280 = vmatpush.msra.mxu0 0.0
  %281 = vmatpush.msra.mxu0 0.0
  %282 = vmatpush.msra.mxu0 0.0
  %283 = vmatpush.msra.mxu0 0.0
  %284 = vmatpush.msra.mxu0 0.0
  %285 = vmatpush.msra.mxu0 0.0
  %286 = vmatpush.msra.mxu0 0.0
  %287 = vmatpush.msra.mxu0 0.0
  %288 = vmatpush.msra.mxu0 0.0
  %289 = vmatpush.msra.mxu0 0.0
  %290 = vmatpush.msra.mxu0 %v277
  %291 = vmatpush.msra.mxu0 %v276
  %292 = vmatpush.msra.mxu0 %v275
  %293 = vmatpush.msra.mxu0 %v274
  %294 = vmatmul.f32.gmra.mxu0 %v132
  %v295 = vpop.f32.mrf.mxu0
  %v296 = vadd.f32 %v116, %v295
  %297 = vmatmul.f32.gmra.mxu0 %v135
  %v298 = vpop.f32.mrf.mxu0
  %v299 = vadd.f32 %v120, %v298
  %300 = vmatmul.f32.gmra.mxu0 %v138
  %v301 = vpop.f32.mrf.mxu0
  %v302 = vadd.f32 %v124, %v301
  %303 = vmatmul.f32.gmra.mxu0 %v141
  %v304 = vpop.f32.mrf.mxu0
  %v305 = vadd.f32 %v128, %v304
  %306 = vdwg.mxu0
  %v307 = vmax.f32 %v296, 0.0
  %v308 = vmax.f32 %v299, 0.0
  %v309 = vmax.f32 %v302, 0.0
  %v310 = vmax.f32 %v305, 0.0
  %311 = vmatpush.msra.mxu0 0.0
  %312 = vmatpush.msra.mxu0 0.0
  %313 = vmatpush.msra.mxu0 0.0
  %314 = vmatpush.msra.mxu0 0.0
  %315 = vmatpush.msra.mxu0 0.0
  %316 = vmatpush.msra.mxu0 0.0
  %317 = vmatpush.msra.mxu0 0.0
  %318 = vmatpush.msra.mxu0 0.0
  %319 = vmatpush.msra.mxu0 0.0
  %320 = vmatpush.msra.mxu0 0.0
  %321 = vmatpush.msra.mxu0 0.0
  %322 = vmatpush.msra.mxu0 0.0
  %323 = vmatpush.msra.mxu0 %v310
  %324 = vmatpush.msra.mxu0 %v309
  %325 = vmatpush.msra.mxu0 %v308
  %326 = vmatpush.msra.mxu0 %v307
  %327 = vmatmul.f32.gmra.mxu0 %v193
  %v328 = vpop.f32.mrf.mxu0
  %v329 = vadd.f32 %v178, %v328
  %330 = vmatmul.f32.gmra.mxu0 %v196
  %v331 = vpop.f32.mrf.mxu0
  %v332 = vadd.f32 %v182, %v331
  %333 = vmatmul.f32.gmra.mxu0 %v199
  %v334 = vpop.f32.mrf.mxu0
  %v335 = vadd.f32 %v186, %v334
  %336 = vmatmul.f32.gmra.mxu0 %v202
  %v337 = vpop.f32.mrf.mxu0
  %v338 = vadd.f32 %v190, %v337
  %339 = vdwg.mxu0
  %v340 = vperm.slane %v244, 3
  %v341 = vmul.f32 %v329, %v340
  %v342 = vmul.f32 %v332, %v340
  %v343 = vmul.f32 %v335, %v340
  %v344 = vmul.f32 %v338, %v340
  %v345 = vadd.f32 %v238, %v341
  %v346 = vadd.f32 %v239, %v342
  %v347 = vadd.f32 %v240, %v343
  %v348 = vadd.f32 %v241, %v344
  %v349 = vadd.f32 %v242, %v244
  %s350 = scalar_lea.vmem %s0, 16
  %v351 = vld [vmem:[%s350] sm:$0xff]
  %352 = vmatpush.msra.mxu0 0.0
  %353 = vmatpush.msra.mxu0 0.0
  %354 = vmatpush.msra.mxu0 0.0
  %355 = vmatpush.msra.mxu0 0.0
  %356 = vmatpush.msra.mxu0 0.0
  %357 = vmatpush.msra.mxu0 0.0
  %358 = vmatpush.msra.mxu0 0.0
  %359 = vmatpush.msra.mxu0 0.0
  %360 = vmatpush.msra.mxu0 0.0
  %361 = vmatpush.msra.mxu0 0.0
  %362 = vmatpush.msra.mxu0 0.0
  %363 = vmatpush.msra.mxu0 0.0
  %364 = vmatpush.msra.mxu0 0.0
  %365 = vmatpush.msra.mxu0 0.0
  %366 = vmatpush.msra.mxu0 0.0
  %367 = vmatpush.msra.mxu0 %v351
  %368 = vmatmul.f32.gmra.mxu0 %v70
  %v369 = vpop.f32.mrf.mxu0
  %v370 = vadd.f32 %v51, %v369
  %371 = vmatmul.f32.gmra.mxu0 %v73
  %v372 = vpop.f32.mrf.mxu0
  %v373 = vadd.f32 %v56, %v372
  %374 = vmatmul.f32.gmra.mxu0 %v76
  %v375 = vpop.f32.mrf.mxu0
  %v376 = vadd.f32 %v61, %v375
  %377 = vmatmul.f32.gmra.mxu0 %v79
  %v378 = vpop.f32.mrf.mxu0
  %v379 = vadd.f32 %v66, %v378
  %380 = vdwg.mxu0
  %v381 = vmax.f32 %v370, 0.0
  %v382 = vmax.f32 %v373, 0.0
  %v383 = vmax.f32 %v376, 0.0
  %v384 = vmax.f32 %v379, 0.0
  %385 = vmatpush.msra.mxu0 0.0
  %386 = vmatpush.msra.mxu0 0.0
  %387 = vmatpush.msra.mxu0 0.0
  %388 = vmatpush.msra.mxu0 0.0
  %389 = vmatpush.msra.mxu0 0.0
  %390 = vmatpush.msra.mxu0 0.0
  %391 = vmatpush.msra.mxu0 0.0
  %392 = vmatpush.msra.mxu0 0.0
  %393 = vmatpush.msra.mxu0 0.0
  %394 = vmatpush.msra.mxu0 0.0
  %395 = vmatpush.msra.mxu0 0.0
  %396 = vmatpush.msra.mxu0 0.0
  %397 = vmatpush.msra.mxu0 %v384
  %398 = vmatpush.msra.mxu0 %v383
  %399 = vmatpush.msra.mxu0 %v382
  %400 = vmatpush.msra.mxu0 %v381
  %401 = vmatmul.f32.gmra.mxu0 %v132
  %v402 = vpop.f32.mrf.mxu0
  %v403 = vadd.f32 %v116, %v402
  %404 = vmatmul.f32.gmra.mxu0 %v135
  %v405 = vpop.f32.mrf.mxu0
  %v406 = vadd.f32 %v120, %v405
  %407 = vmatmul.f32.gmra.mxu0 %v138
  %v408 = vpop.f32.mrf.mxu0
  %v409 = vadd.f32 %v124, %v408
  %410 = vmatmul.f32.gmra.mxu0 %v141
  %v411 = vpop.f32.mrf.mxu0
  %v412 = vadd.f32 %v128, %v411
  %413 = vdwg.mxu0
  %v414 = vmax.f32 %v403, 0.0
  %v415 = vmax.f32 %v406, 0.0
  %v416 = vmax.f32 %v409, 0.0
  %v417 = vmax.f32 %v412, 0.0
  %418 = vmatpush.msra.mxu0 0.0
  %419 = vmatpush.msra.mxu0 0.0
  %420 = vmatpush.msra.mxu0 0.0
  %421 = vmatpush.msra.mxu0 0.0
  %422 = vmatpush.msra.mxu0 0.0
  %423 = vmatpush.msra.mxu0 0.0
  %424 = vmatpush.msra.mxu0 0.0
  %425 = vmatpush.msra.mxu0 0.0
  %426 = vmatpush.msra.mxu0 0.0
  %427 = vmatpush.msra.mxu0 0.0
  %428 = vmatpush.msra.mxu0 0.0
  %429 = vmatpush.msra.mxu0 0.0
  %430 = vmatpush.msra.mxu0 %v417
  %431 = vmatpush.msra.mxu0 %v416
  %432 = vmatpush.msra.mxu0 %v415
  %433 = vmatpush.msra.mxu0 %v414
  %434 = vmatmul.f32.gmra.mxu0 %v193
  %v435 = vpop.f32.mrf.mxu0
  %v436 = vadd.f32 %v178, %v435
  %437 = vmatmul.f32.gmra.mxu0 %v196
  %v438 = vpop.f32.mrf.mxu0
  %v439 = vadd.f32 %v182, %v438
  %440 = vmatmul.f32.gmra.mxu0 %v199
  %v441 = vpop.f32.mrf.mxu0
  %v442 = vadd.f32 %v186, %v441
  %443 = vmatmul.f32.gmra.mxu0 %v202
  %v444 = vpop.f32.mrf.mxu0
  %v445 = vadd.f32 %v190, %v444
  %446 = vdwg.mxu0
  %v447 = vperm.slane %v351, 3
  %v448 = vmul.f32 %v436, %v447
  %v449 = vmul.f32 %v439, %v447
  %v450 = vmul.f32 %v442, %v447
  %v451 = vmul.f32 %v445, %v447
  %v452 = vadd.f32 %v345, %v448
  %v453 = vadd.f32 %v346, %v449
  %v454 = vadd.f32 %v347, %v450
  %v455 = vadd.f32 %v348, %v451
  %v456 = vadd.f32 %v349, %v351
  %s457 = scalar_lea.vmem %s0, 24
  %v458 = vld [vmem:[%s457] sm:$0xff]
  %459 = vmatpush.msra.mxu0 0.0
  %460 = vmatpush.msra.mxu0 0.0
  %461 = vmatpush.msra.mxu0 0.0
  %462 = vmatpush.msra.mxu0 0.0
  %463 = vmatpush.msra.mxu0 0.0
  %464 = vmatpush.msra.mxu0 0.0
  %465 = vmatpush.msra.mxu0 0.0
  %466 = vmatpush.msra.mxu0 0.0
  %467 = vmatpush.msra.mxu0 0.0
  %468 = vmatpush.msra.mxu0 0.0
  %469 = vmatpush.msra.mxu0 0.0
  %470 = vmatpush.msra.mxu0 0.0
  %471 = vmatpush.msra.mxu0 0.0
  %472 = vmatpush.msra.mxu0 0.0
  %473 = vmatpush.msra.mxu0 0.0
  %474 = vmatpush.msra.mxu0 %v458
  %475 = vmatmul.f32.gmra.mxu0 %v70
  %v476 = vpop.f32.mrf.mxu0
  %v477 = vadd.f32 %v51, %v476
  %478 = vmatmul.f32.gmra.mxu0 %v73
  %v479 = vpop.f32.mrf.mxu0
  %v480 = vadd.f32 %v56, %v479
  %481 = vmatmul.f32.gmra.mxu0 %v76
  %v482 = vpop.f32.mrf.mxu0
  %v483 = vadd.f32 %v61, %v482
  %484 = vmatmul.f32.gmra.mxu0 %v79
  %v485 = vpop.f32.mrf.mxu0
  %v486 = vadd.f32 %v66, %v485
  %487 = vdwg.mxu0
  %v488 = vmax.f32 %v477, 0.0
  %v489 = vmax.f32 %v480, 0.0
  %v490 = vmax.f32 %v483, 0.0
  %v491 = vmax.f32 %v486, 0.0
  %492 = vmatpush.msra.mxu0 0.0
  %493 = vmatpush.msra.mxu0 0.0
  %494 = vmatpush.msra.mxu0 0.0
  %495 = vmatpush.msra.mxu0 0.0
  %496 = vmatpush.msra.mxu0 0.0
  %497 = vmatpush.msra.mxu0 0.0
  %498 = vmatpush.msra.mxu0 0.0
  %499 = vmatpush.msra.mxu0 0.0
  %500 = vmatpush.msra.mxu0 0.0
  %501 = vmatpush.msra.mxu0 0.0
  %502 = vmatpush.msra.mxu0 0.0
  %503 = vmatpush.msra.mxu0 0.0
  %504 = vmatpush.msra.mxu0 %v491
  %505 = vmatpush.msra.mxu0 %v490
  %506 = vmatpush.msra.mxu0 %v489
  %507 = vmatpush.msra.mxu0 %v488
  %508 = vmatmul.f32.gmra.mxu0 %v132
  %v509 = vpop.f32.mrf.mxu0
  %v510 = vadd.f32 %v116, %v509
  %511 = vmatmul.f32.gmra.mxu0 %v135
  %v512 = vpop.f32.mrf.mxu0
  %v513 = vadd.f32 %v120, %v512
  %514 = vmatmul.f32.gmra.mxu0 %v138
  %v515 = vpop.f32.mrf.mxu0
  %v516 = vadd.f32 %v124, %v515
  %517 = vmatmul.f32.gmra.mxu0 %v141
  %v518 = vpop.f32.mrf.mxu0
  %v519 = vadd.f32 %v128, %v518
  %520 = vdwg.mxu0
  %v521 = vmax.f32 %v510, 0.0
  %v522 = vmax.f32 %v513, 0.0
  %v523 = vmax.f32 %v516, 0.0
  %v524 = vmax.f32 %v519, 0.0
  %525 = vmatpush.msra.mxu0 0.0
  %526 = vmatpush.msra.mxu0 0.0
  %527 = vmatpush.msra.mxu0 0.0
  %528 = vmatpush.msra.mxu0 0.0
  %529 = vmatpush.msra.mxu0 0.0
  %530 = vmatpush.msra.mxu0 0.0
  %531 = vmatpush.msra.mxu0 0.0
  %532 = vmatpush.msra.mxu0 0.0
  %533 = vmatpush.msra.mxu0 0.0
  %534 = vmatpush.msra.mxu0 0.0
  %535 = vmatpush.msra.mxu0 0.0
  %536 = vmatpush.msra.mxu0 0.0
  %537 = vmatpush.msra.mxu0 %v524
  %538 = vmatpush.msra.mxu0 %v523
  %539 = vmatpush.msra.mxu0 %v522
  %540 = vmatpush.msra.mxu0 %v521
  %541 = vmatmul.f32.gmra.mxu0 %v193
  %v542 = vpop.f32.mrf.mxu0
  %v543 = vadd.f32 %v178, %v542
  %544 = vmatmul.f32.gmra.mxu0 %v196
  %v545 = vpop.f32.mrf.mxu0
  %v546 = vadd.f32 %v182, %v545
  %547 = vmatmul.f32.gmra.mxu0 %v199
  %v548 = vpop.f32.mrf.mxu0
  %v549 = vadd.f32 %v186, %v548
  %550 = vmatmul.f32.gmra.mxu0 %v202
  %v551 = vpop.f32.mrf.mxu0
  %v552 = vadd.f32 %v190, %v551
  %553 = vdwg.mxu0
  %v554 = vperm.slane %v458, 3
  %v555 = vmul.f32 %v543, %v554
  %v556 = vmul.f32 %v546, %v554
  %v557 = vmul.f32 %v549, %v554
  %v558 = vmul.f32 %v552, %v554
  %v559 = vadd.f32 %v452, %v555
  %v560 = vadd.f32 %v453, %v556
  %v561 = vadd.f32 %v454, %v557
  %v562 = vadd.f32 %v455, %v558
  %v563 = vadd.f32 %v456, %v458
  %s564 = scalar_lea.vmem %s0, 32
  %v565 = vld [vmem:[%s564] sm:$0xff]
  %566 = vmatpush.msra.mxu0 0.0
  %567 = vmatpush.msra.mxu0 0.0
  %568 = vmatpush.msra.mxu0 0.0
  %569 = vmatpush.msra.mxu0 0.0
  %570 = vmatpush.msra.mxu0 0.0
  %571 = vmatpush.msra.mxu0 0.0
  %572 = vmatpush.msra.mxu0 0.0
  %573 = vmatpush.msra.mxu0 0.0
  %574 = vmatpush.msra.mxu0 0.0
  %575 = vmatpush.msra.mxu0 0.0
  %576 = vmatpush.msra.mxu0 0.0
  %577 = vmatpush.msra.mxu0 0.0
  %578 = vmatpush.msra.mxu0 0.0
  %579 = vmatpush.msra.mxu0 0.0
  %580 = vmatpush.msra.mxu0 0.0
  %581 = vmatpush.msra.mxu0 %v565
  %582 = vmatmul.f32.gmra.mxu0 %v70
  %v583 = vpop.f32.mrf.mxu0
  %v584 = vadd.f32 %v51, %v583
  %585 = vmatmul.f32.gmra.mxu0 %v73
  %v586 = vpop.f32.mrf.mxu0
  %v587 = vadd.f32 %v56, %v586
  %588 = vmatmul.f32.gmra.mxu0 %v76
  %v589 = vpop.f32.mrf.mxu0
  %v590 = vadd.f32 %v61, %v589
  %591 = vmatmul.f32.gmra.mxu0 %v79
  %v592 = vpop.f32.mrf.mxu0
  %v593 = vadd.f32 %v66, %v592
  %594 = vdwg.mxu0
  %v595 = vmax.f32 %v584, 0.0
  %v596 = vmax.f32 %v587, 0.0
  %v597 = vmax.f32 %v590, 0.0
  %v598 = vmax.f32 %v593, 0.0
  %599 = vmatpush.msra.mxu0 0.0
  %600 = vmatpush.msra.mxu0 0.0
  %601 = vmatpush.msra.mxu0 0.0
  %602 = vmatpush.msra.mxu0 0.0
  %603 = vmatpush.msra.mxu0 0.0
  %604 = vmatpush.msra.mxu0 0.0
  %605 = vmatpush.msra.mxu0 0.0
  %606 = vmatpush.msra.mxu0 0.0
  %607 = vmatpush.msra.mxu0 0.0
  %608 = vmatpush.msra.mxu0 0.0
  %609 = vmatpush.msra.mxu0 0.0
  %610 = vmatpush.msra.mxu0 0.0
  %611 = vmatpush.msra.mxu0 %v598
  %612 = vmatpush.msra.mxu0 %v597
  %613 = vmatpush.msra.mxu0 %v596
  %614 = vmatpush.msra.mxu0 %v595
  %615 = vmatmul.f32.gmra.mxu0 %v132
  %v616 = vpop.f32.mrf.mxu0
  %v617 = vadd.f32 %v116, %v616
  %618 = vmatmul.f32.gmra.mxu0 %v135
  %v619 = vpop.f32.mrf.mxu0
  %v620 = vadd.f32 %v120, %v619
  %621 = vmatmul.f32.gmra.mxu0 %v138
  %v622 = vpop.f32.mrf.mxu0
  %v623 = vadd.f32 %v124, %v622
  %624 = vmatmul.f32.gmra.mxu0 %v141
  %v625 = vpop.f32.mrf.mxu0
  %v626 = vadd.f32 %v128, %v625
  %627 = vdwg.mxu0
  %v628 = vmax.f32 %v617, 0.0
  %v629 = vmax.f32 %v620, 0.0
  %v630 = vmax.f32 %v623, 0.0
  %v631 = vmax.f32 %v626, 0.0
  %632 = vmatpush.msra.mxu0 0.0
  %633 = vmatpush.msra.mxu0 0.0
  %634 = vmatpush.msra.mxu0 0.0
  %635 = vmatpush.msra.mxu0 0.0
  %636 = vmatpush.msra.mxu0 0.0
  %637 = vmatpush.msra.mxu0 0.0
  %638 = vmatpush.msra.mxu0 0.0
  %639 = vmatpush.msra.mxu0 0.0
  %640 = vmatpush.msra.mxu0 0.0
  %641 = vmatpush.msra.mxu0 0.0
  %642 = vmatpush.msra.mxu0 0.0
  %643 = vmatpush.msra.mxu0 0.0
  %644 = vmatpush.msra.mxu0 %v631
  %645 = vmatpush.msra.mxu0 %v630
  %646 = vmatpush.msra.mxu0 %v629
  %647 = vmatpush.msra.mxu0 %v628
  %648 = vmatmul.f32.gmra.mxu0 %v193
  %v649 = vpop.f32.mrf.mxu0
  %v650 = vadd.f32 %v178, %v649
  %651 = vmatmul.f32.gmra.mxu0 %v196
  %v652 = vpop.f32.mrf.mxu0
  %v653 = vadd.f32 %v182, %v652
  %654 = vmatmul.f32.gmra.mxu0 %v199
  %v655 = vpop.f32.mrf.mxu0
  %v656 = vadd.f32 %v186, %v655
  %657 = vmatmul.f32.gmra.mxu0 %v202
  %v658 = vpop.f32.mrf.mxu0
  %v659 = vadd.f32 %v190, %v658
  %660 = vdwg.mxu0
  %v661 = vperm.slane %v565, 3
  %v662 = vmul.f32 %v650, %v661
  %v663 = vmul.f32 %v653, %v661
  %v664 = vmul.f32 %v656, %v661
  %v665 = vmul.f32 %v659, %v661
  %v666 = vadd.f32 %v559, %v662
  %v667 = vadd.f32 %v560, %v663
  %v668 = vadd.f32 %v561, %v664
  %v669 = vadd.f32 %v562, %v665
  %v670 = vadd.f32 %v563, %v565
  %s671 = scalar_lea.vmem %s0, 40
  %v672 = vld [vmem:[%s671] sm:$0xff]
  %673 = vmatpush.msra.mxu0 0.0
  %674 = vmatpush.msra.mxu0 0.0
  %675 = vmatpush.msra.mxu0 0.0
  %676 = vmatpush.msra.mxu0 0.0
  %677 = vmatpush.msra.mxu0 0.0
  %678 = vmatpush.msra.mxu0 0.0
  %679 = vmatpush.msra.mxu0 0.0
  %680 = vmatpush.msra.mxu0 0.0
  %681 = vmatpush.msra.mxu0 0.0
  %682 = vmatpush.msra.mxu0 0.0
  %683 = vmatpush.msra.mxu0 0.0
  %684 = vmatpush.msra.mxu0 0.0
  %685 = vmatpush.msra.mxu0 0.0
  %686 = vmatpush.msra.mxu0 0.0
  %687 = vmatpush.msra.mxu0 0.0
  %688 = vmatpush.msra.mxu0 %v672
  %689 = vmatmul.f32.gmra.mxu0 %v70
  %v690 = vpop.f32.mrf.mxu0
  %v691 = vadd.f32 %v51, %v690
  %692 = vmatmul.f32.gmra.mxu0 %v73
  %v693 = vpop.f32.mrf.mxu0
  %v694 = vadd.f32 %v56, %v693
  %695 = vmatmul.f32.gmra.mxu0 %v76
  %v696 = vpop.f32.mrf.mxu0
  %v697 = vadd.f32 %v61, %v696
  %698 = vmatmul.f32.gmra.mxu0 %v79
  %v699 = vpop.f32.mrf.mxu0
  %v700 = vadd.f32 %v66, %v699
  %701 = vdwg.mxu0
  %v702 = vmax.f32 %v691, 0.0
  %v703 = vmax.f32 %v694, 0.0
  %v704 = vmax.f32 %v697, 0.0
  %v705 = vmax.f32 %v700, 0.0
  %706 = vmatpush.msra.mxu0 0.0
  %707 = vmatpush.msra.mxu0 0.0
  %708 = vmatpush.msra.mxu0 0.0
  %709 = vmatpush.msra.mxu0 0.0
  %710 = vmatpush.msra.mxu0 0.0
  %711 = vmatpush.msra.mxu0 0.0
  %712 = vmatpush.msra.mxu0 0.0
  %713 = vmatpush.msra.mxu0 0.0
  %714 = vmatpush.msra.mxu0 0.0
  %715 = vmatpush.msra.mxu0 0.0
  %716 = vmatpush.msra.mxu0 0.0
  %717 = vmatpush.msra.mxu0 0.0
  %718 = vmatpush.msra.mxu0 %v705
  %719 = vmatpush.msra.mxu0 %v704
  %720 = vmatpush.msra.mxu0 %v703
  %721 = vmatpush.msra.mxu0 %v702
  %722 = vmatmul.f32.gmra.mxu0 %v132
  %v723 = vpop.f32.mrf.mxu0
  %v724 = vadd.f32 %v116, %v723
  %725 = vmatmul.f32.gmra.mxu0 %v135
  %v726 = vpop.f32.mrf.mxu0
  %v727 = vadd.f32 %v120, %v726
  %728 = vmatmul.f32.gmra.mxu0 %v138
  %v729 = vpop.f32.mrf.mxu0
  %v730 = vadd.f32 %v124, %v729
  %731 = vmatmul.f32.gmra.mxu0 %v141
  %v732 = vpop.f32.mrf.mxu0
  %v733 = vadd.f32 %v128, %v732
  %734 = vdwg.mxu0
  %v735 = vmax.f32 %v724, 0.0
  %v736 = vmax.f32 %v727, 0.0
  %v737 = vmax.f32 %v730, 0.0
  %v738 = vmax.f32 %v733, 0.0
  %739 = vmatpush.msra.mxu0 0.0
  %740 = vmatpush.msra.mxu0 0.0
  %741 = vmatpush.msra.mxu0 0.0
  %742 = vmatpush.msra.mxu0 0.0
  %743 = vmatpush.msra.mxu0 0.0
  %744 = vmatpush.msra.mxu0 0.0
  %745 = vmatpush.msra.mxu0 0.0
  %746 = vmatpush.msra.mxu0 0.0
  %747 = vmatpush.msra.mxu0 0.0
  %748 = vmatpush.msra.mxu0 0.0
  %749 = vmatpush.msra.mxu0 0.0
  %750 = vmatpush.msra.mxu0 0.0
  %751 = vmatpush.msra.mxu0 %v738
  %752 = vmatpush.msra.mxu0 %v737
  %753 = vmatpush.msra.mxu0 %v736
  %754 = vmatpush.msra.mxu0 %v735
  %755 = vmatmul.f32.gmra.mxu0 %v193
  %v756 = vpop.f32.mrf.mxu0
  %v757 = vadd.f32 %v178, %v756
  %758 = vmatmul.f32.gmra.mxu0 %v196
  %v759 = vpop.f32.mrf.mxu0
  %v760 = vadd.f32 %v182, %v759
  %761 = vmatmul.f32.gmra.mxu0 %v199
  %v762 = vpop.f32.mrf.mxu0
  %v763 = vadd.f32 %v186, %v762
  %764 = vmatmul.f32.gmra.mxu0 %v202
  %v765 = vpop.f32.mrf.mxu0
  %v766 = vadd.f32 %v190, %v765
  %767 = vdwg.mxu0
  %v768 = vperm.slane %v672, 3
  %v769 = vmul.f32 %v757, %v768
  %v770 = vmul.f32 %v760, %v768
  %v771 = vmul.f32 %v763, %v768
  %v772 = vmul.f32 %v766, %v768
  %v773 = vadd.f32 %v666, %v769
  %v774 = vadd.f32 %v667, %v770
  %v775 = vadd.f32 %v668, %v771
  %v776 = vadd.f32 %v669, %v772
  %v777 = vadd.f32 %v670, %v672
  %s778 = scalar_lea.vmem %s0, 48
  %v779 = vld [vmem:[%s778] sm:$0xff]
  %780 = vmatpush.msra.mxu0 0.0
  %781 = vmatpush.msra.mxu0 0.0
  %782 = vmatpush.msra.mxu0 0.0
  %783 = vmatpush.msra.mxu0 0.0
  %784 = vmatpush.msra.mxu0 0.0
  %785 = vmatpush.msra.mxu0 0.0
  %786 = vmatpush.msra.mxu0 0.0
  %787 = vmatpush.msra.mxu0 0.0
  %788 = vmatpush.msra.mxu0 0.0
  %789 = vmatpush.msra.mxu0 0.0
  %790 = vmatpush.msra.mxu0 0.0
  %791 = vmatpush.msra.mxu0 0.0
  %792 = vmatpush.msra.mxu0 0.0
  %793 = vmatpush.msra.mxu0 0.0
  %794 = vmatpush.msra.mxu0 0.0
  %795 = vmatpush.msra.mxu0 %v779
  %796 = vmatmul.f32.gmra.mxu0 %v70
  %v797 = vpop.f32.mrf.mxu0
  %v798 = vadd.f32 %v51, %v797
  %799 = vmatmul.f32.gmra.mxu0 %v73
  %v800 = vpop.f32.mrf.mxu0
  %v801 = vadd.f32 %v56, %v800
  %802 = vmatmul.f32.gmra.mxu0 %v76
  %v803 = vpop.f32.mrf.mxu0
  %v804 = vadd.f32 %v61, %v803
  %805 = vmatmul.f32.gmra.mxu0 %v79
  %v806 = vpop.f32.mrf.mxu0
  %v807 = vadd.f32 %v66, %v806
  %808 = vdwg.mxu0
  %v809 = vmax.f32 %v798, 0.0
  %v810 = vmax.f32 %v801, 0.0
  %v811 = vmax.f32 %v804, 0.0
  %v812 = vmax.f32 %v807, 0.0
  %813 = vmatpush.msra.mxu0 0.0
  %814 = vmatpush.msra.mxu0 0.0
  %815 = vmatpush.msra.mxu0 0.0
  %816 = vmatpush.msra.mxu0 0.0
  %817 = vmatpush.msra.mxu0 0.0
  %818 = vmatpush.msra.mxu0 0.0
  %819 = vmatpush.msra.mxu0 0.0
  %820 = vmatpush.msra.mxu0 0.0
  %821 = vmatpush.msra.mxu0 0.0
  %822 = vmatpush.msra.mxu0 0.0
  %823 = vmatpush.msra.mxu0 0.0
  %824 = vmatpush.msra.mxu0 0.0
  %825 = vmatpush.msra.mxu0 %v812
  %826 = vmatpush.msra.mxu0 %v811
  %827 = vmatpush.msra.mxu0 %v810
  %828 = vmatpush.msra.mxu0 %v809
  %829 = vmatmul.f32.gmra.mxu0 %v132
  %v830 = vpop.f32.mrf.mxu0
  %v831 = vadd.f32 %v116, %v830
  %832 = vmatmul.f32.gmra.mxu0 %v135
  %v833 = vpop.f32.mrf.mxu0
  %v834 = vadd.f32 %v120, %v833
  %835 = vmatmul.f32.gmra.mxu0 %v138
  %v836 = vpop.f32.mrf.mxu0
  %v837 = vadd.f32 %v124, %v836
  %838 = vmatmul.f32.gmra.mxu0 %v141
  %v839 = vpop.f32.mrf.mxu0
  %v840 = vadd.f32 %v128, %v839
  %841 = vdwg.mxu0
  %v842 = vmax.f32 %v831, 0.0
  %v843 = vmax.f32 %v834, 0.0
  %v844 = vmax.f32 %v837, 0.0
  %v845 = vmax.f32 %v840, 0.0
  %846 = vmatpush.msra.mxu0 0.0
  %847 = vmatpush.msra.mxu0 0.0
  %848 = vmatpush.msra.mxu0 0.0
  %849 = vmatpush.msra.mxu0 0.0
  %850 = vmatpush.msra.mxu0 0.0
  %851 = vmatpush.msra.mxu0 0.0
  %852 = vmatpush.msra.mxu0 0.0
  %853 = vmatpush.msra.mxu0 0.0
  %854 = vmatpush.msra.mxu0 0.0
  %855 = vmatpush.msra.mxu0 0.0
  %856 = vmatpush.msra.mxu0 0.0
  %857 = vmatpush.msra.mxu0 0.0
  %858 = vmatpush.msra.mxu0 %v845
  %859 = vmatpush.msra.mxu0 %v844
  %860 = vmatpush.msra.mxu0 %v843
  %861 = vmatpush.msra.mxu0 %v842
  %862 = vmatmul.f32.gmra.mxu0 %v193
  %v863 = vpop.f32.mrf.mxu0
  %v864 = vadd.f32 %v178, %v863
  %865 = vmatmul.f32.gmra.mxu0 %v196
  %v866 = vpop.f32.mrf.mxu0
  %v867 = vadd.f32 %v182, %v866
  %868 = vmatmul.f32.gmra.mxu0 %v199
  %v869 = vpop.f32.mrf.mxu0
  %v870 = vadd.f32 %v186, %v869
  %871 = vmatmul.f32.gmra.mxu0 %v202
  %v872 = vpop.f32.mrf.mxu0
  %v873 = vadd.f32 %v190, %v872
  %874 = vdwg.mxu0
  %v875 = vperm.slane %v779, 3
  %v876 = vmul.f32 %v864, %v875
  %v877 = vmul.f32 %v867, %v875
  %v878 = vmul.f32 %v870, %v875
  %v879 = vmul.f32 %v873, %v875
  %v880 = vadd.f32 %v773, %v876
  %v881 = vadd.f32 %v774, %v877
  %v882 = vadd.f32 %v775, %v878
  %v883 = vadd.f32 %v776, %v879
  %v884 = vadd.f32 %v777, %v779
  %s885 = scalar_lea.vmem %s0, 56
  %v886 = vld [vmem:[%s885] sm:$0xff]
  %887 = vmatpush.msra.mxu0 0.0
  %888 = vmatpush.msra.mxu0 0.0
  %889 = vmatpush.msra.mxu0 0.0
  %890 = vmatpush.msra.mxu0 0.0
  %891 = vmatpush.msra.mxu0 0.0
  %892 = vmatpush.msra.mxu0 0.0
  %893 = vmatpush.msra.mxu0 0.0
  %894 = vmatpush.msra.mxu0 0.0
  %895 = vmatpush.msra.mxu0 0.0
  %896 = vmatpush.msra.mxu0 0.0
  %897 = vmatpush.msra.mxu0 0.0
  %898 = vmatpush.msra.mxu0 0.0
  %899 = vmatpush.msra.mxu0 0.0
  %900 = vmatpush.msra.mxu0 0.0
  %901 = vmatpush.msra.mxu0 0.0
  %902 = vmatpush.msra.mxu0 %v886
  %903 = vmatmul.f32.gmra.mxu0 %v70
  %v904 = vpop.f32.mrf.mxu0
  %v905 = vadd.f32 %v51, %v904
  %906 = vmatmul.f32.gmra.mxu0 %v73
  %v907 = vpop.f32.mrf.mxu0
  %v908 = vadd.f32 %v56, %v907
  %909 = vmatmul.f32.gmra.mxu0 %v76
  %v910 = vpop.f32.mrf.mxu0
  %v911 = vadd.f32 %v61, %v910
  %912 = vmatmul.f32.gmra.mxu0 %v79
  %v913 = vpop.f32.mrf.mxu0
  %v914 = vadd.f32 %v66, %v913
  %915 = vdwg.mxu0
  %v916 = vmax.f32 %v905, 0.0
  %v917 = vmax.f32 %v908, 0.0
  %v918 = vmax.f32 %v911, 0.0
  %v919 = vmax.f32 %v914, 0.0
  %920 = vmatpush.msra.mxu0 0.0
  %921 = vmatpush.msra.mxu0 0.0
  %922 = vmatpush.msra.mxu0 0.0
  %923 = vmatpush.msra.mxu0 0.0
  %924 = vmatpush.msra.mxu0 0.0
  %925 = vmatpush.msra.mxu0 0.0
  %926 = vmatpush.msra.mxu0 0.0
  %927 = vmatpush.msra.mxu0 0.0
  %928 = vmatpush.msra.mxu0 0.0
  %929 = vmatpush.msra.mxu0 0.0
  %930 = vmatpush.msra.mxu0 0.0
  %931 = vmatpush.msra.mxu0 0.0
  %932 = vmatpush.msra.mxu0 %v919
  %933 = vmatpush.msra.mxu0 %v918
  %934 = vmatpush.msra.mxu0 %v917
  %935 = vmatpush.msra.mxu0 %v916
  %936 = vmatmul.f32.gmra.mxu0 %v132
  %v937 = vpop.f32.mrf.mxu0
  %v938 = vadd.f32 %v116, %v937
  %939 = vmatmul.f32.gmra.mxu0 %v135
  %v940 = vpop.f32.mrf.mxu0
  %v941 = vadd.f32 %v120, %v940
  %942 = vmatmul.f32.gmra.mxu0 %v138
  %v943 = vpop.f32.mrf.mxu0
  %v944 = vadd.f32 %v124, %v943
  %945 = vmatmul.f32.gmra.mxu0 %v141
  %v946 = vpop.f32.mrf.mxu0
  %v947 = vadd.f32 %v128, %v946
  %948 = vdwg.mxu0
  %v949 = vmax.f32 %v938, 0.0
  %v950 = vmax.f32 %v941, 0.0
  %v951 = vmax.f32 %v944, 0.0
  %v952 = vmax.f32 %v947, 0.0
  %953 = vmatpush.msra.mxu0 0.0
  %954 = vmatpush.msra.mxu0 0.0
  %955 = vmatpush.msra.mxu0 0.0
  %956 = vmatpush.msra.mxu0 0.0
  %957 = vmatpush.msra.mxu0 0.0
  %958 = vmatpush.msra.mxu0 0.0
  %959 = vmatpush.msra.mxu0 0.0
  %960 = vmatpush.msra.mxu0 0.0
  %961 = vmatpush.msra.mxu0 0.0
  %962 = vmatpush.msra.mxu0 0.0
  %963 = vmatpush.msra.mxu0 0.0
  %964 = vmatpush.msra.mxu0 0.0
  %965 = vmatpush.msra.mxu0 %v952
  %966 = vmatpush.msra.mxu0 %v951
  %967 = vmatpush.msra.mxu0 %v950
  %968 = vmatpush.msra.mxu0 %v949
  %969 = vmatmul.f32.gmra.mxu0 %v193
  %v970 = vpop.f32.mrf.mxu0
  %v971 = vadd.f32 %v178, %v970
  %972 = vmatmul.f32.gmra.mxu0 %v196
  %v973 = vpop.f32.mrf.mxu0
  %v974 = vadd.f32 %v182, %v973
  %975 = vmatmul.f32.gmra.mxu0 %v199
  %v976 = vpop.f32.mrf.mxu0
  %v977 = vadd.f32 %v186, %v976
  %978 = vmatmul.f32.gmra.mxu0 %v202
  %v979 = vpop.f32.mrf.mxu0
  %v980 = vadd.f32 %v190, %v979
  %981 = vdwg.mxu0
  %v982 = vperm.slane %v886, 3
  %v983 = vmul.f32 %v971, %v982
  %v984 = vmul.f32 %v974, %v982
  %v985 = vmul.f32 %v977, %v982
  %v986 = vmul.f32 %v980, %v982
  %v987 = vadd.f32 %v880, %v983
  %v988 = vadd.f32 %v881, %v984
  %v989 = vadd.f32 %v882, %v985
  %v990 = vadd.f32 %v883, %v986
  %v991 = vadd.f32 %v884, %v886
  %v992 = vperm.slane %v991, 3
  %v993 = vrcp.pop %v992
  %v994 = vmul.f32 %v992, %v993
  %v995 = vsub.f32 1.0, %v994
  %v996 = vmul.f32 %v993, %v995
  %v997 = vadd.f32 %v993, %v996
  %vm998 = vweird.f32 %v992
  %vm999 = vweird.f32 %v993
  %vm1000 = vmor %vm998, %vm999
  %v1001 = vsel %vm1000, %v993, %v997
  %v1002 = vand.u32 2147483647, %v992
  %vm1003 = vcmp.eq.f32.partialorder %v1002, 8.507059e+37
  %v1004 = vand.u32 %v992, 2147483648
  %v1005 = vor.u32 1.1754944e-38, %v1004
  %v1006 = vsel %vm1003, %v1005, %v1001
  %v1007 = vmul.f32 %v987, %v1006
  %v1008 = vmul.f32 %v988, %v1006
  %v1009 = vmul.f32 %v989, %v1006
  %v1010 = vmul.f32 %v990, %v1006
  %1011 = vset.pattern.permute.xlu0 3
  %1012 = vperm.xlu0 %1011, %v42
  %v1013 = vpop.permute.xlu0 %1012
  %1015 = vset.pattern.permute.xlu0 3
  %1016 = vperm.xlu0 %1015, %v43
  %v1017 = vpop.permute.xlu0 %1016
  %1019 = vset.pattern.permute.xlu0 3
  %1020 = vperm.xlu0 %1019, %v44
  %v1021 = vpop.permute.xlu0 %1020
  %1023 = vset.pattern.permute.xlu0 3
  %1024 = vperm.xlu0 %1023, %v45
  %v1025 = vpop.permute.xlu0 %1024
  %v1028 = vsel %vm130, %v29, 0
  %v1031 = vsel %vm130, %v30, 0
  %v1034 = vsel %vm130, %v31, 0
  %v1037 = vsel %vm130, %v32, 0
  %1039 = vmatpush.msra.mxu0 0.0
  %1040 = vmatpush.msra.mxu0 0.0
  %1041 = vmatpush.msra.mxu0 0.0
  %1042 = vmatpush.msra.mxu0 0.0
  %1043 = vmatpush.msra.mxu0 0.0
  %1044 = vmatpush.msra.mxu0 0.0
  %1045 = vmatpush.msra.mxu0 0.0
  %1046 = vmatpush.msra.mxu0 0.0
  %1047 = vmatpush.msra.mxu0 0.0
  %1048 = vmatpush.msra.mxu0 0.0
  %1049 = vmatpush.msra.mxu0 0.0
  %1050 = vmatpush.msra.mxu0 0.0
  %1051 = vmatpush.msra.mxu0 %v1010
  %1052 = vmatpush.msra.mxu0 %v1009
  %1053 = vmatpush.msra.mxu0 %v1008
  %1054 = vmatpush.msra.mxu0 %v1007
  %1055 = vmatmul.f32.gmra.mxu0 %v1028
  %v1056 = vpop.f32.mrf.mxu0
  %v1057 = vadd.f32 %v1013, %v1056
  %1058 = vmatmul.f32.gmra.mxu0 %v1031
  %v1059 = vpop.f32.mrf.mxu0
  %v1060 = vadd.f32 %v1017, %v1059
  %1061 = vmatmul.f32.gmra.mxu0 %v1034
  %v1062 = vpop.f32.mrf.mxu0
  %v1063 = vadd.f32 %v1021, %v1062
  %1064 = vmatmul.f32.gmra.mxu0 %v1037
  %v1065 = vpop.f32.mrf.mxu0
  %v1066 = vadd.f32 %v1025, %v1065
  %1067 = vdwg.mxu0
  %v1068 = vld [vmem:[%s1] sm:$0xff]
  %v1070 = vsel %vm68, %v33, 0
  %v1073 = vsel %vm68, %v34, 0
  %v1076 = vsel %vm68, %v35, 0
  %v1079 = vsel %vm68, %v36, 0
  %1081 = vmatpush.msra.mxu0 0.0
  %1082 = vmatpush.msra.mxu0 0.0
  %1083 = vmatpush.msra.mxu0 0.0
  %1084 = vmatpush.msra.mxu0 0.0
  %1085 = vmatpush.msra.mxu0 0.0
  %1086 = vmatpush.msra.mxu0 0.0
  %1087 = vmatpush.msra.mxu0 0.0
  %1088 = vmatpush.msra.mxu0 0.0
  %1089 = vmatpush.msra.mxu0 0.0
  %1090 = vmatpush.msra.mxu0 0.0
  %1091 = vmatpush.msra.mxu0 0.0
  %1092 = vmatpush.msra.mxu0 0.0
  %1093 = vmatpush.msra.mxu0 0.0
  %1094 = vmatpush.msra.mxu0 0.0
  %1095 = vmatpush.msra.mxu0 0.0
  %1096 = vmatpush.msra.mxu0 %v1068
  %1097 = vmatmul.f32.gmra.mxu0 %v1070
  %v1098 = vpop.f32.mrf.mxu0
  %v1099 = vadd.f32 0.0, %v1098
  %1100 = vmatmul.f32.gmra.mxu0 %v1073
  %v1101 = vpop.f32.mrf.mxu0
  %v1102 = vadd.f32 0.0, %v1101
  %1103 = vmatmul.f32.gmra.mxu0 %v1076
  %v1104 = vpop.f32.mrf.mxu0
  %v1105 = vadd.f32 0.0, %v1104
  %1106 = vmatmul.f32.gmra.mxu0 %v1079
  %v1107 = vpop.f32.mrf.mxu0
  %v1108 = vadd.f32 0.0, %v1107
  %1109 = vdwg.mxu0
  %v1110 = vadd.f32 %v1057, %v1099
  %v1111 = vadd.f32 %v1060, %v1102
  %v1112 = vadd.f32 %v1063, %v1105
  %v1113 = vadd.f32 %v1066, %v1108
  %v1114 = vmax.f32 %v1110, 0.0
  %v1115 = vmax.f32 %v1111, 0.0
  %v1116 = vmax.f32 %v1112, 0.0
  %v1117 = vmax.f32 %v1113, 0.0
  %1118 = vset.pattern.permute.xlu0 4
  %1119 = vperm.xlu0 %1118, %v42
  %v1120 = vpop.permute.xlu0 %1119
  %1122 = vset.pattern.permute.xlu0 4
  %1123 = vperm.xlu0 %1122, %v43
  %v1124 = vpop.permute.xlu0 %1123
  %1126 = vset.pattern.permute.xlu0 4
  %1127 = vperm.xlu0 %1126, %v44
  %v1128 = vpop.permute.xlu0 %1127
  %1130 = vset.pattern.permute.xlu0 4
  %1131 = vperm.xlu0 %1130, %v45
  %v1132 = vpop.permute.xlu0 %1131
  %v1135 = vsel %vm130, %v37, 0
  %v1138 = vsel %vm130, %v38, 0
  %v1141 = vsel %vm130, %v39, 0
  %v1144 = vsel %vm130, %v40, 0
  %1146 = vmatpush.msra.mxu0 0.0
  %1147 = vmatpush.msra.mxu0 0.0
  %1148 = vmatpush.msra.mxu0 0.0
  %1149 = vmatpush.msra.mxu0 0.0
  %1150 = vmatpush.msra.mxu0 0.0
  %1151 = vmatpush.msra.mxu0 0.0
  %1152 = vmatpush.msra.mxu0 0.0
  %1153 = vmatpush.msra.mxu0 0.0
  %1154 = vmatpush.msra.mxu0 0.0
  %1155 = vmatpush.msra.mxu0 0.0
  %1156 = vmatpush.msra.mxu0 0.0
  %1157 = vmatpush.msra.mxu0 0.0
  %1158 = vmatpush.msra.mxu0 %v1117
  %1159 = vmatpush.msra.mxu0 %v1116
  %1160 = vmatpush.msra.mxu0 %v1115
  %1161 = vmatpush.msra.mxu0 %v1114
  %1162 = vmatmul.f32.gmra.mxu0 %v1135
  %v1163 = vpop.f32.mrf.mxu0
  %v1164 = vadd.f32 %v1120, %v1163
  %1165 = vmatmul.f32.gmra.mxu0 %v1138
  %v1166 = vpop.f32.mrf.mxu0
  %v1167 = vadd.f32 %v1124, %v1166
  %1168 = vmatmul.f32.gmra.mxu0 %v1141
  %v1169 = vpop.f32.mrf.mxu0
  %v1170 = vadd.f32 %v1128, %v1169
  %1171 = vmatmul.f32.gmra.mxu0 %v1144
  %v1172 = vpop.f32.mrf.mxu0
  %v1173 = vadd.f32 %v1132, %v1172
  %1174 = vdwg.mxu0
  %v1175 = vmax.f32 %v1164, 0.0
  %v1176 = vmax.f32 %v1167, 0.0
  %v1177 = vmax.f32 %v1170, 0.0
  %v1178 = vmax.f32 %v1173, 0.0
  %1180 = vset.pattern.permute.xlu0 5
  %1181 = vperm.xlu0 %1180, %v46
  %v1182 = vpop.permute.xlu0 %1181
  %v1185 = vsel %vm130, %v41, 0
  %1187 = vmatpush.msra.mxu0 0.0
  %1188 = vmatpush.msra.mxu0 0.0
  %1189 = vmatpush.msra.mxu0 0.0
  %1190 = vmatpush.msra.mxu0 0.0
  %1191 = vmatpush.msra.mxu0 0.0
  %1192 = vmatpush.msra.mxu0 0.0
  %1193 = vmatpush.msra.mxu0 0.0
  %1194 = vmatpush.msra.mxu0 0.0
  %1195 = vmatpush.msra.mxu0 0.0
  %1196 = vmatpush.msra.mxu0 0.0
  %1197 = vmatpush.msra.mxu0 0.0
  %1198 = vmatpush.msra.mxu0 0.0
  %1199 = vmatpush.msra.mxu0 %v1178
  %1200 = vmatpush.msra.mxu0 %v1177
  %1201 = vmatpush.msra.mxu0 %v1176
  %1202 = vmatpush.msra.mxu0 %v1175
  %1203 = vmatmul.f32.gmra.mxu0 %v1185
  %v1204 = vpop.f32.mrf.mxu0
  %v1205 = vadd.f32 %v1182, %v1204
  %1206 = vdwg.mxu0
  %v1207 = vmax.f32 %v1205, 0.0
  %vm1208 = vcmp.ne.f32.partialorder %v1205, %v1205
  %v1209 = vadd.f32 %v1205, 0.0
  %v1210 = vand.u32 2147483647, %v1205
  %v1211 = vsub.f32 0.0, %v1210
  %v1212 = vmul.f32 %v1211, 1.442695
  %v1213 = vpow.pop %v1212
  %v1214 = vadd.f32 %v1213, 1.0
  %v1215 = vlog2.pop %v1214
  %v1216 = vmul.f32 %v1215, 0.6931472
  %v1217 = vmul.f32 -0.5, %v1213
  %v1218 = vadd.f32 %v1217, 1.0
  %v1219 = vmul.f32 %v1218, %v1213
  %v1220 = vand.u32 2147483647, %v1213
  %vm1221 = vcmp.lt.f32.partialorder %v1220, 0.0004427343
  %v1222 = vsel %vm1221, %v1219, %v1216
  %v1223 = vadd.f32 %v1207, %v1222
  %v1224 = vsel %vm1208, %v1209, %v1223
  %v1225 = vadd.f32 %v1224, 0.1
  %s1226 = scalar_lea.vmem %s1, 8
  %v1227 = vld [vmem:[%s1226] sm:$0xff]
  %1228 = vmatpush.msra.mxu0 0.0
  %1229 = vmatpush.msra.mxu0 0.0
  %1230 = vmatpush.msra.mxu0 0.0
  %1231 = vmatpush.msra.mxu0 0.0
  %1232 = vmatpush.msra.mxu0 0.0
  %1233 = vmatpush.msra.mxu0 0.0
  %1234 = vmatpush.msra.mxu0 0.0
  %1235 = vmatpush.msra.mxu0 0.0
  %1236 = vmatpush.msra.mxu0 0.0
  %1237 = vmatpush.msra.mxu0 0.0
  %1238 = vmatpush.msra.mxu0 0.0
  %1239 = vmatpush.msra.mxu0 0.0
  %1240 = vmatpush.msra.mxu0 0.0
  %1241 = vmatpush.msra.mxu0 0.0
  %1242 = vmatpush.msra.mxu0 0.0
  %1243 = vmatpush.msra.mxu0 %v1227
  %1244 = vmatmul.f32.gmra.mxu0 %v1070
  %v1245 = vpop.f32.mrf.mxu0
  %v1246 = vadd.f32 0.0, %v1245
  %1247 = vmatmul.f32.gmra.mxu0 %v1073
  %v1248 = vpop.f32.mrf.mxu0
  %v1249 = vadd.f32 0.0, %v1248
  %1250 = vmatmul.f32.gmra.mxu0 %v1076
  %v1251 = vpop.f32.mrf.mxu0
  %v1252 = vadd.f32 0.0, %v1251
  %1253 = vmatmul.f32.gmra.mxu0 %v1079
  %v1254 = vpop.f32.mrf.mxu0
  %v1255 = vadd.f32 0.0, %v1254
  %1256 = vdwg.mxu0
  %v1257 = vadd.f32 %v1057, %v1246
  %v1258 = vadd.f32 %v1060, %v1249
  %v1259 = vadd.f32 %v1063, %v1252
  %v1260 = vadd.f32 %v1066, %v1255
  %v1261 = vmax.f32 %v1257, 0.0
  %v1262 = vmax.f32 %v1258, 0.0
  %v1263 = vmax.f32 %v1259, 0.0
  %v1264 = vmax.f32 %v1260, 0.0
  %1265 = vmatpush.msra.mxu0 0.0
  %1266 = vmatpush.msra.mxu0 0.0
  %1267 = vmatpush.msra.mxu0 0.0
  %1268 = vmatpush.msra.mxu0 0.0
  %1269 = vmatpush.msra.mxu0 0.0
  %1270 = vmatpush.msra.mxu0 0.0
  %1271 = vmatpush.msra.mxu0 0.0
  %1272 = vmatpush.msra.mxu0 0.0
  %1273 = vmatpush.msra.mxu0 0.0
  %1274 = vmatpush.msra.mxu0 0.0
  %1275 = vmatpush.msra.mxu0 0.0
  %1276 = vmatpush.msra.mxu0 0.0
  %1277 = vmatpush.msra.mxu0 %v1264
  %1278 = vmatpush.msra.mxu0 %v1263
  %1279 = vmatpush.msra.mxu0 %v1262
  %1280 = vmatpush.msra.mxu0 %v1261
  %1281 = vmatmul.f32.gmra.mxu0 %v1135
  %v1282 = vpop.f32.mrf.mxu0
  %v1283 = vadd.f32 %v1120, %v1282
  %1284 = vmatmul.f32.gmra.mxu0 %v1138
  %v1285 = vpop.f32.mrf.mxu0
  %v1286 = vadd.f32 %v1124, %v1285
  %1287 = vmatmul.f32.gmra.mxu0 %v1141
  %v1288 = vpop.f32.mrf.mxu0
  %v1289 = vadd.f32 %v1128, %v1288
  %1290 = vmatmul.f32.gmra.mxu0 %v1144
  %v1291 = vpop.f32.mrf.mxu0
  %v1292 = vadd.f32 %v1132, %v1291
  %1293 = vdwg.mxu0
  %v1294 = vmax.f32 %v1283, 0.0
  %v1295 = vmax.f32 %v1286, 0.0
  %v1296 = vmax.f32 %v1289, 0.0
  %v1297 = vmax.f32 %v1292, 0.0
  %1298 = vmatpush.msra.mxu0 0.0
  %1299 = vmatpush.msra.mxu0 0.0
  %1300 = vmatpush.msra.mxu0 0.0
  %1301 = vmatpush.msra.mxu0 0.0
  %1302 = vmatpush.msra.mxu0 0.0
  %1303 = vmatpush.msra.mxu0 0.0
  %1304 = vmatpush.msra.mxu0 0.0
  %1305 = vmatpush.msra.mxu0 0.0
  %1306 = vmatpush.msra.mxu0 0.0
  %1307 = vmatpush.msra.mxu0 0.0
  %1308 = vmatpush.msra.mxu0 0.0
  %1309 = vmatpush.msra.mxu0 0.0
  %1310 = vmatpush.msra.mxu0 %v1297
  %1311 = vmatpush.msra.mxu0 %v1296
  %1312 = vmatpush.msra.mxu0 %v1295
  %1313 = vmatpush.msra.mxu0 %v1294
  %1314 = vmatmul.f32.gmra.mxu0 %v1185
  %v1315 = vpop.f32.mrf.mxu0
  %v1316 = vadd.f32 %v1182, %v1315
  %1317 = vdwg.mxu0
  %v1318 = vmax.f32 %v1316, 0.0
  %vm1319 = vcmp.ne.f32.partialorder %v1316, %v1316
  %v1320 = vadd.f32 %v1316, 0.0
  %v1321 = vand.u32 2147483647, %v1316
  %v1322 = vsub.f32 0.0, %v1321
  %v1323 = vmul.f32 %v1322, 1.442695
  %v1324 = vpow.pop %v1323
  %v1325 = vadd.f32 %v1324, 1.0
  %v1326 = vlog2.pop %v1325
  %v1327 = vmul.f32 %v1326, 0.6931472
  %v1328 = vmul.f32 -0.5, %v1324
  %v1329 = vadd.f32 %v1328, 1.0
  %v1330 = vmul.f32 %v1329, %v1324
  %v1331 = vand.u32 2147483647, %v1324
  %vm1332 = vcmp.lt.f32.partialorder %v1331, 0.0004427343
  %v1333 = vsel %vm1332, %v1330, %v1327
  %v1334 = vadd.f32 %v1318, %v1333
  %v1335 = vsel %vm1319, %v1320, %v1334
  %v1336 = vadd.f32 %v1335, 0.1
  %s1337 = scalar_lea.vmem %s1, 16
  %v1338 = vld [vmem:[%s1337] sm:$0xff]
  %1339 = vmatpush.msra.mxu0 0.0
  %1340 = vmatpush.msra.mxu0 0.0
  %1341 = vmatpush.msra.mxu0 0.0
  %1342 = vmatpush.msra.mxu0 0.0
  %1343 = vmatpush.msra.mxu0 0.0
  %1344 = vmatpush.msra.mxu0 0.0
  %1345 = vmatpush.msra.mxu0 0.0
  %1346 = vmatpush.msra.mxu0 0.0
  %1347 = vmatpush.msra.mxu0 0.0
  %1348 = vmatpush.msra.mxu0 0.0
  %1349 = vmatpush.msra.mxu0 0.0
  %1350 = vmatpush.msra.mxu0 0.0
  %1351 = vmatpush.msra.mxu0 0.0
  %1352 = vmatpush.msra.mxu0 0.0
  %1353 = vmatpush.msra.mxu0 0.0
  %1354 = vmatpush.msra.mxu0 %v1338
  %1355 = vmatmul.f32.gmra.mxu0 %v1070
  %v1356 = vpop.f32.mrf.mxu0
  %v1357 = vadd.f32 0.0, %v1356
  %1358 = vmatmul.f32.gmra.mxu0 %v1073
  %v1359 = vpop.f32.mrf.mxu0
  %v1360 = vadd.f32 0.0, %v1359
  %1361 = vmatmul.f32.gmra.mxu0 %v1076
  %v1362 = vpop.f32.mrf.mxu0
  %v1363 = vadd.f32 0.0, %v1362
  %1364 = vmatmul.f32.gmra.mxu0 %v1079
  %v1365 = vpop.f32.mrf.mxu0
  %v1366 = vadd.f32 0.0, %v1365
  %1367 = vdwg.mxu0
  %v1368 = vadd.f32 %v1057, %v1357
  %v1369 = vadd.f32 %v1060, %v1360
  %v1370 = vadd.f32 %v1063, %v1363
  %v1371 = vadd.f32 %v1066, %v1366
  %v1372 = vmax.f32 %v1368, 0.0
  %v1373 = vmax.f32 %v1369, 0.0
  %v1374 = vmax.f32 %v1370, 0.0
  %v1375 = vmax.f32 %v1371, 0.0
  %1376 = vmatpush.msra.mxu0 0.0
  %1377 = vmatpush.msra.mxu0 0.0
  %1378 = vmatpush.msra.mxu0 0.0
  %1379 = vmatpush.msra.mxu0 0.0
  %1380 = vmatpush.msra.mxu0 0.0
  %1381 = vmatpush.msra.mxu0 0.0
  %1382 = vmatpush.msra.mxu0 0.0
  %1383 = vmatpush.msra.mxu0 0.0
  %1384 = vmatpush.msra.mxu0 0.0
  %1385 = vmatpush.msra.mxu0 0.0
  %1386 = vmatpush.msra.mxu0 0.0
  %1387 = vmatpush.msra.mxu0 0.0
  %1388 = vmatpush.msra.mxu0 %v1375
  %1389 = vmatpush.msra.mxu0 %v1374
  %1390 = vmatpush.msra.mxu0 %v1373
  %1391 = vmatpush.msra.mxu0 %v1372
  %1392 = vmatmul.f32.gmra.mxu0 %v1135
  %v1393 = vpop.f32.mrf.mxu0
  %v1394 = vadd.f32 %v1120, %v1393
  %1395 = vmatmul.f32.gmra.mxu0 %v1138
  %v1396 = vpop.f32.mrf.mxu0
  %v1397 = vadd.f32 %v1124, %v1396
  %1398 = vmatmul.f32.gmra.mxu0 %v1141
  %v1399 = vpop.f32.mrf.mxu0
  %v1400 = vadd.f32 %v1128, %v1399
  %1401 = vmatmul.f32.gmra.mxu0 %v1144
  %v1402 = vpop.f32.mrf.mxu0
  %v1403 = vadd.f32 %v1132, %v1402
  %1404 = vdwg.mxu0
  %v1405 = vmax.f32 %v1394, 0.0
  %v1406 = vmax.f32 %v1397, 0.0
  %v1407 = vmax.f32 %v1400, 0.0
  %v1408 = vmax.f32 %v1403, 0.0
  %1409 = vmatpush.msra.mxu0 0.0
  %1410 = vmatpush.msra.mxu0 0.0
  %1411 = vmatpush.msra.mxu0 0.0
  %1412 = vmatpush.msra.mxu0 0.0
  %1413 = vmatpush.msra.mxu0 0.0
  %1414 = vmatpush.msra.mxu0 0.0
  %1415 = vmatpush.msra.mxu0 0.0
  %1416 = vmatpush.msra.mxu0 0.0
  %1417 = vmatpush.msra.mxu0 0.0
  %1418 = vmatpush.msra.mxu0 0.0
  %1419 = vmatpush.msra.mxu0 0.0
  %1420 = vmatpush.msra.mxu0 0.0
  %1421 = vmatpush.msra.mxu0 %v1408
  %1422 = vmatpush.msra.mxu0 %v1407
  %1423 = vmatpush.msra.mxu0 %v1406
  %1424 = vmatpush.msra.mxu0 %v1405
  %1425 = vmatmul.f32.gmra.mxu0 %v1185
  %v1426 = vpop.f32.mrf.mxu0
  %v1427 = vadd.f32 %v1182, %v1426
  %1428 = vdwg.mxu0
  %v1429 = vmax.f32 %v1427, 0.0
  %vm1430 = vcmp.ne.f32.partialorder %v1427, %v1427
  %v1431 = vadd.f32 %v1427, 0.0
  %v1432 = vand.u32 2147483647, %v1427
  %v1433 = vsub.f32 0.0, %v1432
  %v1434 = vmul.f32 %v1433, 1.442695
  %v1435 = vpow.pop %v1434
  %v1436 = vadd.f32 %v1435, 1.0
  %v1437 = vlog2.pop %v1436
  %v1438 = vmul.f32 %v1437, 0.6931472
  %v1439 = vmul.f32 -0.5, %v1435
  %v1440 = vadd.f32 %v1439, 1.0
  %v1441 = vmul.f32 %v1440, %v1435
  %v1442 = vand.u32 2147483647, %v1435
  %vm1443 = vcmp.lt.f32.partialorder %v1442, 0.0004427343
  %v1444 = vsel %vm1443, %v1441, %v1438
  %v1445 = vadd.f32 %v1429, %v1444
  %v1446 = vsel %vm1430, %v1431, %v1445
  %v1447 = vadd.f32 %v1446, 0.1
  %s1448 = scalar_lea.vmem %s1, 24
  %v1449 = vld [vmem:[%s1448] sm:$0xff]
  %1450 = vmatpush.msra.mxu0 0.0
  %1451 = vmatpush.msra.mxu0 0.0
  %1452 = vmatpush.msra.mxu0 0.0
  %1453 = vmatpush.msra.mxu0 0.0
  %1454 = vmatpush.msra.mxu0 0.0
  %1455 = vmatpush.msra.mxu0 0.0
  %1456 = vmatpush.msra.mxu0 0.0
  %1457 = vmatpush.msra.mxu0 0.0
  %1458 = vmatpush.msra.mxu0 0.0
  %1459 = vmatpush.msra.mxu0 0.0
  %1460 = vmatpush.msra.mxu0 0.0
  %1461 = vmatpush.msra.mxu0 0.0
  %1462 = vmatpush.msra.mxu0 0.0
  %1463 = vmatpush.msra.mxu0 0.0
  %1464 = vmatpush.msra.mxu0 0.0
  %1465 = vmatpush.msra.mxu0 %v1449
  %1466 = vmatmul.f32.gmra.mxu0 %v1070
  %v1467 = vpop.f32.mrf.mxu0
  %v1468 = vadd.f32 0.0, %v1467
  %1469 = vmatmul.f32.gmra.mxu0 %v1073
  %v1470 = vpop.f32.mrf.mxu0
  %v1471 = vadd.f32 0.0, %v1470
  %1472 = vmatmul.f32.gmra.mxu0 %v1076
  %v1473 = vpop.f32.mrf.mxu0
  %v1474 = vadd.f32 0.0, %v1473
  %1475 = vmatmul.f32.gmra.mxu0 %v1079
  %v1476 = vpop.f32.mrf.mxu0
  %v1477 = vadd.f32 0.0, %v1476
  %1478 = vdwg.mxu0
  %v1479 = vadd.f32 %v1057, %v1468
  %v1480 = vadd.f32 %v1060, %v1471
  %v1481 = vadd.f32 %v1063, %v1474
  %v1482 = vadd.f32 %v1066, %v1477
  %v1483 = vmax.f32 %v1479, 0.0
  %v1484 = vmax.f32 %v1480, 0.0
  %v1485 = vmax.f32 %v1481, 0.0
  %v1486 = vmax.f32 %v1482, 0.0
  %1487 = vmatpush.msra.mxu0 0.0
  %1488 = vmatpush.msra.mxu0 0.0
  %1489 = vmatpush.msra.mxu0 0.0
  %1490 = vmatpush.msra.mxu0 0.0
  %1491 = vmatpush.msra.mxu0 0.0
  %1492 = vmatpush.msra.mxu0 0.0
  %1493 = vmatpush.msra.mxu0 0.0
  %1494 = vmatpush.msra.mxu0 0.0
  %1495 = vmatpush.msra.mxu0 0.0
  %1496 = vmatpush.msra.mxu0 0.0
  %1497 = vmatpush.msra.mxu0 0.0
  %1498 = vmatpush.msra.mxu0 0.0
  %1499 = vmatpush.msra.mxu0 %v1486
  %1500 = vmatpush.msra.mxu0 %v1485
  %1501 = vmatpush.msra.mxu0 %v1484
  %1502 = vmatpush.msra.mxu0 %v1483
  %1503 = vmatmul.f32.gmra.mxu0 %v1135
  %v1504 = vpop.f32.mrf.mxu0
  %v1505 = vadd.f32 %v1120, %v1504
  %1506 = vmatmul.f32.gmra.mxu0 %v1138
  %v1507 = vpop.f32.mrf.mxu0
  %v1508 = vadd.f32 %v1124, %v1507
  %1509 = vmatmul.f32.gmra.mxu0 %v1141
  %v1510 = vpop.f32.mrf.mxu0
  %v1511 = vadd.f32 %v1128, %v1510
  %1512 = vmatmul.f32.gmra.mxu0 %v1144
  %v1513 = vpop.f32.mrf.mxu0
  %v1514 = vadd.f32 %v1132, %v1513
  %1515 = vdwg.mxu0
  %v1516 = vmax.f32 %v1505, 0.0
  %v1517 = vmax.f32 %v1508, 0.0
  %v1518 = vmax.f32 %v1511, 0.0
  %v1519 = vmax.f32 %v1514, 0.0
  %1520 = vmatpush.msra.mxu0 0.0
  %1521 = vmatpush.msra.mxu0 0.0
  %1522 = vmatpush.msra.mxu0 0.0
  %1523 = vmatpush.msra.mxu0 0.0
  %1524 = vmatpush.msra.mxu0 0.0
  %1525 = vmatpush.msra.mxu0 0.0
  %1526 = vmatpush.msra.mxu0 0.0
  %1527 = vmatpush.msra.mxu0 0.0
  %1528 = vmatpush.msra.mxu0 0.0
  %1529 = vmatpush.msra.mxu0 0.0
  %1530 = vmatpush.msra.mxu0 0.0
  %1531 = vmatpush.msra.mxu0 0.0
  %1532 = vmatpush.msra.mxu0 %v1519
  %1533 = vmatpush.msra.mxu0 %v1518
  %1534 = vmatpush.msra.mxu0 %v1517
  %1535 = vmatpush.msra.mxu0 %v1516
  %1536 = vmatmul.f32.gmra.mxu0 %v1185
  %v1537 = vpop.f32.mrf.mxu0
  %v1538 = vadd.f32 %v1182, %v1537
  %1539 = vdwg.mxu0
  %v1540 = vmax.f32 %v1538, 0.0
  %vm1541 = vcmp.ne.f32.partialorder %v1538, %v1538
  %v1542 = vadd.f32 %v1538, 0.0
  %v1543 = vand.u32 2147483647, %v1538
  %v1544 = vsub.f32 0.0, %v1543
  %v1545 = vmul.f32 %v1544, 1.442695
  %v1546 = vpow.pop %v1545
  %v1547 = vadd.f32 %v1546, 1.0
  %v1548 = vlog2.pop %v1547
  %v1549 = vmul.f32 %v1548, 0.6931472
  %v1550 = vmul.f32 -0.5, %v1546
  %v1551 = vadd.f32 %v1550, 1.0
  %v1552 = vmul.f32 %v1551, %v1546
  %v1553 = vand.u32 2147483647, %v1546
  %vm1554 = vcmp.lt.f32.partialorder %v1553, 0.0004427343
  %v1555 = vsel %vm1554, %v1552, %v1549
  %v1556 = vadd.f32 %v1540, %v1555
  %v1557 = vsel %vm1541, %v1542, %v1556
  %v1558 = vadd.f32 %v1557, 0.1
  %s1559 = scalar_lea.vmem %s1, 32
  %v1560 = vld [vmem:[%s1559] sm:$0xff]
  %1561 = vmatpush.msra.mxu0 0.0
  %1562 = vmatpush.msra.mxu0 0.0
  %1563 = vmatpush.msra.mxu0 0.0
  %1564 = vmatpush.msra.mxu0 0.0
  %1565 = vmatpush.msra.mxu0 0.0
  %1566 = vmatpush.msra.mxu0 0.0
  %1567 = vmatpush.msra.mxu0 0.0
  %1568 = vmatpush.msra.mxu0 0.0
  %1569 = vmatpush.msra.mxu0 0.0
  %1570 = vmatpush.msra.mxu0 0.0
  %1571 = vmatpush.msra.mxu0 0.0
  %1572 = vmatpush.msra.mxu0 0.0
  %1573 = vmatpush.msra.mxu0 0.0
  %1574 = vmatpush.msra.mxu0 0.0
  %1575 = vmatpush.msra.mxu0 0.0
  %1576 = vmatpush.msra.mxu0 %v1560
  %1577 = vmatmul.f32.gmra.mxu0 %v1070
  %v1578 = vpop.f32.mrf.mxu0
  %v1579 = vadd.f32 0.0, %v1578
  %1580 = vmatmul.f32.gmra.mxu0 %v1073
  %v1581 = vpop.f32.mrf.mxu0
  %v1582 = vadd.f32 0.0, %v1581
  %1583 = vmatmul.f32.gmra.mxu0 %v1076
  %v1584 = vpop.f32.mrf.mxu0
  %v1585 = vadd.f32 0.0, %v1584
  %1586 = vmatmul.f32.gmra.mxu0 %v1079
  %v1587 = vpop.f32.mrf.mxu0
  %v1588 = vadd.f32 0.0, %v1587
  %1589 = vdwg.mxu0
  %v1590 = vadd.f32 %v1057, %v1579
  %v1591 = vadd.f32 %v1060, %v1582
  %v1592 = vadd.f32 %v1063, %v1585
  %v1593 = vadd.f32 %v1066, %v1588
  %v1594 = vmax.f32 %v1590, 0.0
  %v1595 = vmax.f32 %v1591, 0.0
  %v1596 = vmax.f32 %v1592, 0.0
  %v1597 = vmax.f32 %v1593, 0.0
  %1598 = vmatpush.msra.mxu0 0.0
  %1599 = vmatpush.msra.mxu0 0.0
  %1600 = vmatpush.msra.mxu0 0.0
  %1601 = vmatpush.msra.mxu0 0.0
  %1602 = vmatpush.msra.mxu0 0.0
  %1603 = vmatpush.msra.mxu0 0.0
  %1604 = vmatpush.msra.mxu0 0.0
  %1605 = vmatpush.msra.mxu0 0.0
  %1606 = vmatpush.msra.mxu0 0.0
  %1607 = vmatpush.msra.mxu0 0.0
  %1608 = vmatpush.msra.mxu0 0.0
  %1609 = vmatpush.msra.mxu0 0.0
  %1610 = vmatpush.msra.mxu0 %v1597
  %1611 = vmatpush.msra.mxu0 %v1596
  %1612 = vmatpush.msra.mxu0 %v1595
  %1613 = vmatpush.msra.mxu0 %v1594
  %1614 = vmatmul.f32.gmra.mxu0 %v1135
  %v1615 = vpop.f32.mrf.mxu0
  %v1616 = vadd.f32 %v1120, %v1615
  %1617 = vmatmul.f32.gmra.mxu0 %v1138
  %v1618 = vpop.f32.mrf.mxu0
  %v1619 = vadd.f32 %v1124, %v1618
  %1620 = vmatmul.f32.gmra.mxu0 %v1141
  %v1621 = vpop.f32.mrf.mxu0
  %v1622 = vadd.f32 %v1128, %v1621
  %1623 = vmatmul.f32.gmra.mxu0 %v1144
  %v1624 = vpop.f32.mrf.mxu0
  %v1625 = vadd.f32 %v1132, %v1624
  %1626 = vdwg.mxu0
  %v1627 = vmax.f32 %v1616, 0.0
  %v1628 = vmax.f32 %v1619, 0.0
  %v1629 = vmax.f32 %v1622, 0.0
  %v1630 = vmax.f32 %v1625, 0.0
  %1631 = vmatpush.msra.mxu0 0.0
  %1632 = vmatpush.msra.mxu0 0.0
  %1633 = vmatpush.msra.mxu0 0.0
  %1634 = vmatpush.msra.mxu0 0.0
  %1635 = vmatpush.msra.mxu0 0.0
  %1636 = vmatpush.msra.mxu0 0.0
  %1637 = vmatpush.msra.mxu0 0.0
  %1638 = vmatpush.msra.mxu0 0.0
  %1639 = vmatpush.msra.mxu0 0.0
  %1640 = vmatpush.msra.mxu0 0.0
  %1641 = vmatpush.msra.mxu0 0.0
  %1642 = vmatpush.msra.mxu0 0.0
  %1643 = vmatpush.msra.mxu0 %v1630
  %1644 = vmatpush.msra.mxu0 %v1629
  %1645 = vmatpush.msra.mxu0 %v1628
  %1646 = vmatpush.msra.mxu0 %v1627
  %1647 = vmatmul.f32.gmra.mxu0 %v1185
  %v1648 = vpop.f32.mrf.mxu0
  %v1649 = vadd.f32 %v1182, %v1648
  %1650 = vdwg.mxu0
  %v1651 = vmax.f32 %v1649, 0.0
  %vm1652 = vcmp.ne.f32.partialorder %v1649, %v1649
  %v1653 = vadd.f32 %v1649, 0.0
  %v1654 = vand.u32 2147483647, %v1649
  %v1655 = vsub.f32 0.0, %v1654
  %v1656 = vmul.f32 %v1655, 1.442695
  %v1657 = vpow.pop %v1656
  %v1658 = vadd.f32 %v1657, 1.0
  %v1659 = vlog2.pop %v1658
  %v1660 = vmul.f32 %v1659, 0.6931472
  %v1661 = vmul.f32 -0.5, %v1657
  %v1662 = vadd.f32 %v1661, 1.0
  %v1663 = vmul.f32 %v1662, %v1657
  %v1664 = vand.u32 2147483647, %v1657
  %vm1665 = vcmp.lt.f32.partialorder %v1664, 0.0004427343
  %v1666 = vsel %vm1665, %v1663, %v1660
  %v1667 = vadd.f32 %v1651, %v1666
  %v1668 = vsel %vm1652, %v1653, %v1667
  %v1669 = vadd.f32 %v1668, 0.1
  %s1670 = scalar_lea.vmem %s1, 40
  %v1671 = vld [vmem:[%s1670] sm:$0xff]
  %1672 = vmatpush.msra.mxu0 0.0
  %1673 = vmatpush.msra.mxu0 0.0
  %1674 = vmatpush.msra.mxu0 0.0
  %1675 = vmatpush.msra.mxu0 0.0
  %1676 = vmatpush.msra.mxu0 0.0
  %1677 = vmatpush.msra.mxu0 0.0
  %1678 = vmatpush.msra.mxu0 0.0
  %1679 = vmatpush.msra.mxu0 0.0
  %1680 = vmatpush.msra.mxu0 0.0
  %1681 = vmatpush.msra.mxu0 0.0
  %1682 = vmatpush.msra.mxu0 0.0
  %1683 = vmatpush.msra.mxu0 0.0
  %1684 = vmatpush.msra.mxu0 0.0
  %1685 = vmatpush.msra.mxu0 0.0
  %1686 = vmatpush.msra.mxu0 0.0
  %1687 = vmatpush.msra.mxu0 %v1671
  %1688 = vmatmul.f32.gmra.mxu0 %v1070
  %v1689 = vpop.f32.mrf.mxu0
  %v1690 = vadd.f32 0.0, %v1689
  %1691 = vmatmul.f32.gmra.mxu0 %v1073
  %v1692 = vpop.f32.mrf.mxu0
  %v1693 = vadd.f32 0.0, %v1692
  %1694 = vmatmul.f32.gmra.mxu0 %v1076
  %v1695 = vpop.f32.mrf.mxu0
  %v1696 = vadd.f32 0.0, %v1695
  %1697 = vmatmul.f32.gmra.mxu0 %v1079
  %v1698 = vpop.f32.mrf.mxu0
  %v1699 = vadd.f32 0.0, %v1698
  %1700 = vdwg.mxu0
  %v1701 = vadd.f32 %v1057, %v1690
  %v1702 = vadd.f32 %v1060, %v1693
  %v1703 = vadd.f32 %v1063, %v1696
  %v1704 = vadd.f32 %v1066, %v1699
  %v1705 = vmax.f32 %v1701, 0.0
  %v1706 = vmax.f32 %v1702, 0.0
  %v1707 = vmax.f32 %v1703, 0.0
  %v1708 = vmax.f32 %v1704, 0.0
  %1709 = vmatpush.msra.mxu0 0.0
  %1710 = vmatpush.msra.mxu0 0.0
  %1711 = vmatpush.msra.mxu0 0.0
  %1712 = vmatpush.msra.mxu0 0.0
  %1713 = vmatpush.msra.mxu0 0.0
  %1714 = vmatpush.msra.mxu0 0.0
  %1715 = vmatpush.msra.mxu0 0.0
  %1716 = vmatpush.msra.mxu0 0.0
  %1717 = vmatpush.msra.mxu0 0.0
  %1718 = vmatpush.msra.mxu0 0.0
  %1719 = vmatpush.msra.mxu0 0.0
  %1720 = vmatpush.msra.mxu0 0.0
  %1721 = vmatpush.msra.mxu0 %v1708
  %1722 = vmatpush.msra.mxu0 %v1707
  %1723 = vmatpush.msra.mxu0 %v1706
  %1724 = vmatpush.msra.mxu0 %v1705
  %1725 = vmatmul.f32.gmra.mxu0 %v1135
  %v1726 = vpop.f32.mrf.mxu0
  %v1727 = vadd.f32 %v1120, %v1726
  %1728 = vmatmul.f32.gmra.mxu0 %v1138
  %v1729 = vpop.f32.mrf.mxu0
  %v1730 = vadd.f32 %v1124, %v1729
  %1731 = vmatmul.f32.gmra.mxu0 %v1141
  %v1732 = vpop.f32.mrf.mxu0
  %v1733 = vadd.f32 %v1128, %v1732
  %1734 = vmatmul.f32.gmra.mxu0 %v1144
  %v1735 = vpop.f32.mrf.mxu0
  %v1736 = vadd.f32 %v1132, %v1735
  %1737 = vdwg.mxu0
  %v1738 = vmax.f32 %v1727, 0.0
  %v1739 = vmax.f32 %v1730, 0.0
  %v1740 = vmax.f32 %v1733, 0.0
  %v1741 = vmax.f32 %v1736, 0.0
  %1742 = vmatpush.msra.mxu0 0.0
  %1743 = vmatpush.msra.mxu0 0.0
  %1744 = vmatpush.msra.mxu0 0.0
  %1745 = vmatpush.msra.mxu0 0.0
  %1746 = vmatpush.msra.mxu0 0.0
  %1747 = vmatpush.msra.mxu0 0.0
  %1748 = vmatpush.msra.mxu0 0.0
  %1749 = vmatpush.msra.mxu0 0.0
  %1750 = vmatpush.msra.mxu0 0.0
  %1751 = vmatpush.msra.mxu0 0.0
  %1752 = vmatpush.msra.mxu0 0.0
  %1753 = vmatpush.msra.mxu0 0.0
  %1754 = vmatpush.msra.mxu0 %v1741
  %1755 = vmatpush.msra.mxu0 %v1740
  %1756 = vmatpush.msra.mxu0 %v1739
  %1757 = vmatpush.msra.mxu0 %v1738
  %1758 = vmatmul.f32.gmra.mxu0 %v1185
  %v1759 = vpop.f32.mrf.mxu0
  %v1760 = vadd.f32 %v1182, %v1759
  %1761 = vdwg.mxu0
  %v1762 = vmax.f32 %v1760, 0.0
  %vm1763 = vcmp.ne.f32.partialorder %v1760, %v1760
  %v1764 = vadd.f32 %v1760, 0.0
  %v1765 = vand.u32 2147483647, %v1760
  %v1766 = vsub.f32 0.0, %v1765
  %v1767 = vmul.f32 %v1766, 1.442695
  %v1768 = vpow.pop %v1767
  %v1769 = vadd.f32 %v1768, 1.0
  %v1770 = vlog2.pop %v1769
  %v1771 = vmul.f32 %v1770, 0.6931472
  %v1772 = vmul.f32 -0.5, %v1768
  %v1773 = vadd.f32 %v1772, 1.0
  %v1774 = vmul.f32 %v1773, %v1768
  %v1775 = vand.u32 2147483647, %v1768
  %vm1776 = vcmp.lt.f32.partialorder %v1775, 0.0004427343
  %v1777 = vsel %vm1776, %v1774, %v1771
  %v1778 = vadd.f32 %v1762, %v1777
  %v1779 = vsel %vm1763, %v1764, %v1778
  %v1780 = vadd.f32 %v1779, 0.1
  %s1781 = scalar_lea.vmem %s1, 48
  %v1782 = vld [vmem:[%s1781] sm:$0xff]
  %1783 = vmatpush.msra.mxu0 0.0
  %1784 = vmatpush.msra.mxu0 0.0
  %1785 = vmatpush.msra.mxu0 0.0
  %1786 = vmatpush.msra.mxu0 0.0
  %1787 = vmatpush.msra.mxu0 0.0
  %1788 = vmatpush.msra.mxu0 0.0
  %1789 = vmatpush.msra.mxu0 0.0
  %1790 = vmatpush.msra.mxu0 0.0
  %1791 = vmatpush.msra.mxu0 0.0
  %1792 = vmatpush.msra.mxu0 0.0
  %1793 = vmatpush.msra.mxu0 0.0
  %1794 = vmatpush.msra.mxu0 0.0
  %1795 = vmatpush.msra.mxu0 0.0
  %1796 = vmatpush.msra.mxu0 0.0
  %1797 = vmatpush.msra.mxu0 0.0
  %1798 = vmatpush.msra.mxu0 %v1782
  %1799 = vmatmul.f32.gmra.mxu0 %v1070
  %v1800 = vpop.f32.mrf.mxu0
  %v1801 = vadd.f32 0.0, %v1800
  %1802 = vmatmul.f32.gmra.mxu0 %v1073
  %v1803 = vpop.f32.mrf.mxu0
  %v1804 = vadd.f32 0.0, %v1803
  %1805 = vmatmul.f32.gmra.mxu0 %v1076
  %v1806 = vpop.f32.mrf.mxu0
  %v1807 = vadd.f32 0.0, %v1806
  %1808 = vmatmul.f32.gmra.mxu0 %v1079
  %v1809 = vpop.f32.mrf.mxu0
  %v1810 = vadd.f32 0.0, %v1809
  %1811 = vdwg.mxu0
  %v1812 = vadd.f32 %v1057, %v1801
  %v1813 = vadd.f32 %v1060, %v1804
  %v1814 = vadd.f32 %v1063, %v1807
  %v1815 = vadd.f32 %v1066, %v1810
  %v1816 = vmax.f32 %v1812, 0.0
  %v1817 = vmax.f32 %v1813, 0.0
  %v1818 = vmax.f32 %v1814, 0.0
  %v1819 = vmax.f32 %v1815, 0.0
  %1820 = vmatpush.msra.mxu0 0.0
  %1821 = vmatpush.msra.mxu0 0.0
  %1822 = vmatpush.msra.mxu0 0.0
  %1823 = vmatpush.msra.mxu0 0.0
  %1824 = vmatpush.msra.mxu0 0.0
  %1825 = vmatpush.msra.mxu0 0.0
  %1826 = vmatpush.msra.mxu0 0.0
  %1827 = vmatpush.msra.mxu0 0.0
  %1828 = vmatpush.msra.mxu0 0.0
  %1829 = vmatpush.msra.mxu0 0.0
  %1830 = vmatpush.msra.mxu0 0.0
  %1831 = vmatpush.msra.mxu0 0.0
  %1832 = vmatpush.msra.mxu0 %v1819
  %1833 = vmatpush.msra.mxu0 %v1818
  %1834 = vmatpush.msra.mxu0 %v1817
  %1835 = vmatpush.msra.mxu0 %v1816
  %1836 = vmatmul.f32.gmra.mxu0 %v1135
  %v1837 = vpop.f32.mrf.mxu0
  %v1838 = vadd.f32 %v1120, %v1837
  %1839 = vmatmul.f32.gmra.mxu0 %v1138
  %v1840 = vpop.f32.mrf.mxu0
  %v1841 = vadd.f32 %v1124, %v1840
  %1842 = vmatmul.f32.gmra.mxu0 %v1141
  %v1843 = vpop.f32.mrf.mxu0
  %v1844 = vadd.f32 %v1128, %v1843
  %1845 = vmatmul.f32.gmra.mxu0 %v1144
  %v1846 = vpop.f32.mrf.mxu0
  %v1847 = vadd.f32 %v1132, %v1846
  %1848 = vdwg.mxu0
  %v1849 = vmax.f32 %v1838, 0.0
  %v1850 = vmax.f32 %v1841, 0.0
  %v1851 = vmax.f32 %v1844, 0.0
  %v1852 = vmax.f32 %v1847, 0.0
  %1853 = vmatpush.msra.mxu0 0.0
  %1854 = vmatpush.msra.mxu0 0.0
  %1855 = vmatpush.msra.mxu0 0.0
  %1856 = vmatpush.msra.mxu0 0.0
  %1857 = vmatpush.msra.mxu0 0.0
  %1858 = vmatpush.msra.mxu0 0.0
  %1859 = vmatpush.msra.mxu0 0.0
  %1860 = vmatpush.msra.mxu0 0.0
  %1861 = vmatpush.msra.mxu0 0.0
  %1862 = vmatpush.msra.mxu0 0.0
  %1863 = vmatpush.msra.mxu0 0.0
  %1864 = vmatpush.msra.mxu0 0.0
  %1865 = vmatpush.msra.mxu0 %v1852
  %1866 = vmatpush.msra.mxu0 %v1851
  %1867 = vmatpush.msra.mxu0 %v1850
  %1868 = vmatpush.msra.mxu0 %v1849
  %1869 = vmatmul.f32.gmra.mxu0 %v1185
  %v1870 = vpop.f32.mrf.mxu0
  %v1871 = vadd.f32 %v1182, %v1870
  %1872 = vdwg.mxu0
  %v1873 = vmax.f32 %v1871, 0.0
  %vm1874 = vcmp.ne.f32.partialorder %v1871, %v1871
  %v1875 = vadd.f32 %v1871, 0.0
  %v1876 = vand.u32 2147483647, %v1871
  %v1877 = vsub.f32 0.0, %v1876
  %v1878 = vmul.f32 %v1877, 1.442695
  %v1879 = vpow.pop %v1878
  %v1880 = vadd.f32 %v1879, 1.0
  %v1881 = vlog2.pop %v1880
  %v1882 = vmul.f32 %v1881, 0.6931472
  %v1883 = vmul.f32 -0.5, %v1879
  %v1884 = vadd.f32 %v1883, 1.0
  %v1885 = vmul.f32 %v1884, %v1879
  %v1886 = vand.u32 2147483647, %v1879
  %vm1887 = vcmp.lt.f32.partialorder %v1886, 0.0004427343
  %v1888 = vsel %vm1887, %v1885, %v1882
  %v1889 = vadd.f32 %v1873, %v1888
  %v1890 = vsel %vm1874, %v1875, %v1889
  %v1891 = vadd.f32 %v1890, 0.1
  %s1892 = scalar_lea.vmem %s1, 56
  %v1893 = vld [vmem:[%s1892] sm:$0xff]
  %1894 = vmatpush.msra.mxu0 0.0
  %1895 = vmatpush.msra.mxu0 0.0
  %1896 = vmatpush.msra.mxu0 0.0
  %1897 = vmatpush.msra.mxu0 0.0
  %1898 = vmatpush.msra.mxu0 0.0
  %1899 = vmatpush.msra.mxu0 0.0
  %1900 = vmatpush.msra.mxu0 0.0
  %1901 = vmatpush.msra.mxu0 0.0
  %1902 = vmatpush.msra.mxu0 0.0
  %1903 = vmatpush.msra.mxu0 0.0
  %1904 = vmatpush.msra.mxu0 0.0
  %1905 = vmatpush.msra.mxu0 0.0
  %1906 = vmatpush.msra.mxu0 0.0
  %1907 = vmatpush.msra.mxu0 0.0
  %1908 = vmatpush.msra.mxu0 0.0
  %1909 = vmatpush.msra.mxu0 %v1893
  %1910 = vmatmul.f32.gmra.mxu0 %v1070
  %v1911 = vpop.f32.mrf.mxu0
  %v1912 = vadd.f32 0.0, %v1911
  %1913 = vmatmul.f32.gmra.mxu0 %v1073
  %v1914 = vpop.f32.mrf.mxu0
  %v1915 = vadd.f32 0.0, %v1914
  %1916 = vmatmul.f32.gmra.mxu0 %v1076
  %v1917 = vpop.f32.mrf.mxu0
  %v1918 = vadd.f32 0.0, %v1917
  %1919 = vmatmul.f32.gmra.mxu0 %v1079
  %v1920 = vpop.f32.mrf.mxu0
  %v1921 = vadd.f32 0.0, %v1920
  %1922 = vdwg.mxu0
  %v1923 = vadd.f32 %v1057, %v1912
  %v1924 = vadd.f32 %v1060, %v1915
  %v1925 = vadd.f32 %v1063, %v1918
  %v1926 = vadd.f32 %v1066, %v1921
  %v1927 = vmax.f32 %v1923, 0.0
  %v1928 = vmax.f32 %v1924, 0.0
  %v1929 = vmax.f32 %v1925, 0.0
  %v1930 = vmax.f32 %v1926, 0.0
  %1931 = vmatpush.msra.mxu0 0.0
  %1932 = vmatpush.msra.mxu0 0.0
  %1933 = vmatpush.msra.mxu0 0.0
  %1934 = vmatpush.msra.mxu0 0.0
  %1935 = vmatpush.msra.mxu0 0.0
  %1936 = vmatpush.msra.mxu0 0.0
  %1937 = vmatpush.msra.mxu0 0.0
  %1938 = vmatpush.msra.mxu0 0.0
  %1939 = vmatpush.msra.mxu0 0.0
  %1940 = vmatpush.msra.mxu0 0.0
  %1941 = vmatpush.msra.mxu0 0.0
  %1942 = vmatpush.msra.mxu0 0.0
  %1943 = vmatpush.msra.mxu0 %v1930
  %1944 = vmatpush.msra.mxu0 %v1929
  %1945 = vmatpush.msra.mxu0 %v1928
  %1946 = vmatpush.msra.mxu0 %v1927
  %1947 = vmatmul.f32.gmra.mxu0 %v1135
  %v1948 = vpop.f32.mrf.mxu0
  %v1949 = vadd.f32 %v1120, %v1948
  %1950 = vmatmul.f32.gmra.mxu0 %v1138
  %v1951 = vpop.f32.mrf.mxu0
  %v1952 = vadd.f32 %v1124, %v1951
  %1953 = vmatmul.f32.gmra.mxu0 %v1141
  %v1954 = vpop.f32.mrf.mxu0
  %v1955 = vadd.f32 %v1128, %v1954
  %1956 = vmatmul.f32.gmra.mxu0 %v1144
  %v1957 = vpop.f32.mrf.mxu0
  %v1958 = vadd.f32 %v1132, %v1957
  %1959 = vdwg.mxu0
  %v1960 = vmax.f32 %v1949, 0.0
  %v1961 = vmax.f32 %v1952, 0.0
  %v1962 = vmax.f32 %v1955, 0.0
  %v1963 = vmax.f32 %v1958, 0.0
  %1964 = vmatpush.msra.mxu0 0.0
  %1965 = vmatpush.msra.mxu0 0.0
  %1966 = vmatpush.msra.mxu0 0.0
  %1967 = vmatpush.msra.mxu0 0.0
  %1968 = vmatpush.msra.mxu0 0.0
  %1969 = vmatpush.msra.mxu0 0.0
  %1970 = vmatpush.msra.mxu0 0.0
  %1971 = vmatpush.msra.mxu0 0.0
  %1972 = vmatpush.msra.mxu0 0.0
  %1973 = vmatpush.msra.mxu0 0.0
  %1974 = vmatpush.msra.mxu0 0.0
  %1975 = vmatpush.msra.mxu0 0.0
  %1976 = vmatpush.msra.mxu0 %v1963
  %1977 = vmatpush.msra.mxu0 %v1962
  %1978 = vmatpush.msra.mxu0 %v1961
  %1979 = vmatpush.msra.mxu0 %v1960
  %1980 = vmatmul.f32.gmra.mxu0 %v1185
  %v1981 = vpop.f32.mrf.mxu0
  %v1982 = vadd.f32 %v1182, %v1981
  %1983 = vdwg.mxu0
  %v1984 = vmax.f32 %v1982, 0.0
  %vm1985 = vcmp.ne.f32.partialorder %v1982, %v1982
  %v1986 = vadd.f32 %v1982, 0.0
  %v1987 = vand.u32 2147483647, %v1982
  %v1988 = vsub.f32 0.0, %v1987
  %v1989 = vmul.f32 %v1988, 1.442695
  %v1990 = vpow.pop %v1989
  %v1991 = vadd.f32 %v1990, 1.0
  %v1992 = vlog2.pop %v1991
  %v1993 = vmul.f32 %v1992, 0.6931472
  %v1994 = vmul.f32 -0.5, %v1990
  %v1995 = vadd.f32 %v1994, 1.0
  %v1996 = vmul.f32 %v1995, %v1990
  %v1997 = vand.u32 2147483647, %v1990
  %vm1998 = vcmp.lt.f32.partialorder %v1997, 0.0004427343
  %v1999 = vsel %vm1998, %v1996, %v1993
  %v2000 = vadd.f32 %v1984, %v1999
  %v2001 = vsel %vm1985, %v1986, %v2000
  %v2002 = vadd.f32 %v2001, 0.1
  %v2004 = vrot.slane %v1316, 7
  %v2007 = vrot.slane %v1427, 6
  %v2010 = vrot.slane %v1538, 5
  %v2013 = vrot.slane %v1649, 4
  %v2016 = vrot.slane %v1760, 3
  %v2019 = vrot.slane %v1871, 2
  %v2022 = vrot.slane %v1982, 1
  %v2025 = vrot.slane %v1225, 1
  %v2028 = vrot.slane %v1447, 7
  %v2031 = vrot.slane %v1558, 6
  %v2034 = vrot.slane %v1669, 5
  %v2037 = vrot.slane %v1780, 4
  %v2040 = vrot.slane %v1891, 3
  %v2043 = vrot.slane %v2002, 2
  %vm2045 = vcmask 1040384
  %v2046 = vsel %vm2045, %v1205, %v2004
  %vm2047 = vcmask 1041408
  %v2048 = vsel %vm2047, %v2046, %v2007
  %vm2049 = vcmask 1042432
  %v2050 = vsel %vm2049, %v2048, %v2010
  %vm2051 = vcmask 1043456
  %v2052 = vsel %vm2051, %v2050, %v2013
  %vm2053 = vcmask 1044480
  %v2054 = vsel %vm2053, %v2052, %v2016
  %vm2055 = vcmask 1045504
  %v2056 = vsel %vm2055, %v2054, %v2019
  %vm2057 = vcmask 1046528
  %v2058 = vsel %vm2057, %v2056, %v2022
  %v2059 = vsel %vm2045, %v2025, %v1336
  %v2060 = vsel %vm2047, %v2059, %v2028
  %v2061 = vsel %vm2049, %v2060, %v2031
  %v2062 = vsel %vm2051, %v2061, %v2034
  %v2063 = vsel %vm2053, %v2062, %v2037
  %v2064 = vsel %vm2055, %v2063, %v2040
  %v2065 = vsel %vm2057, %v2064, %v2043
  %vm2066 = vcmask 15360
  %2067 = vst.msk [vmem:[%s4] sm:$0xff] %vm2066, %v2058
  %2068 = vst.msk [vmem:[%s4 + $0x8] sm:$0xff] %vm2066, %v2065
  // Predicated region
  $region18: #{_cnp_forward_impl.1} parent=0 // pred_check
    _
  $region19: #{_cnp_forward_impl.1} parent=0 // pred_check_branch
    %2070 = sbr.rel (0) target = $region21
  $region20: #{_cnp_forward_impl.1} parent=0 // pred_region
    _
  $region21: #{_cnp_forward_impl.1} parent=0 // pred_fallthru
    _
  // Predicated region
  $region22: #{_cnp_forward_impl.1} parent=0 // pred_check
    _
  $region23: #{_cnp_forward_impl.1} parent=0 // pred_check_branch
    %2072 = sbr.rel (0) target = $region25
  $region24: #{_cnp_forward_impl.1} parent=0 // pred_region
    _
  $region25: #{_cnp_forward_impl.1} parent=0 // pred_fallthru
    _

</llo_original>
